<compile_context>
chip_gen: v7x
topology: tpu7x:2x2x1
jax: 0.10.0
libtpu: 0.0.40
codegen_flags: <defaults>
</compile_context>

<pallas_src>
import functools

import jax
import jax.numpy as jnp
from jax.experimental import pallas as pl
from jax.experimental.pallas import tpu as pltpu

LANE = 128     # vreg lane width
SUBLANE = 8    # f32 vreg sublane count


def _round_up(x, m):
    return (x + m - 1) // m * m


def _pick_time_chunk(T, max_chunk):
    """Largest divisor of T that is <= max_chunk (T itself must not be padded:
    extra LSTM steps would change the final hidden state)."""
    for c in range(min(T, max_chunk), 0, -1):
        if T % c == 0:
            return c
    return 1


# ----------------------------- fused Pallas kernel ---------------------------

def _make_kernel(t_chunk, Bp, Pmax, Hp):
    """Grid = (num_layers, T // t_chunk).  Refs:
      x_ref      (t_chunk, Bp, Pmax)   streamed embedded chunk (layer 0 input)
      w_ih_ref   (1, Pmax, 4Hp)        this layer's input-proj weights [i,f,o,g]
      w_hh_ref   (1, Hp, 4Hp)          this layer's recurrent weights
      b_ref      (1, 1, 4Hp)           pre-summed bias (f32)
      fc_w_ref   (Hp, Op), fc_b_ref (1, Op)
      out_ref    (Bp, Op)
      seq_scr    (T, Bp, Pmax) f32     inter-layer hidden sequence (persistent)
      h_scr/c_scr (Bp, Hp) f32         recurrent carry across time chunks
    """

    def kernel(x_ref, w_ih_ref, w_hh_ref, b_ref, fc_w_ref, fc_b_ref,
               out_ref, seq_scr, h_scr, c_scr):
        l = pl.program_id(0)
        tc = pl.program_id(1)
        last = jnp.logical_and(l == pl.num_programs(0) - 1,
                               tc == pl.num_programs(1) - 1)

        # Zero initial state at the start of every layer.
        @pl.when(tc == 0)
        def _():
            h_scr[...] = jnp.zeros_like(h_scr)
            c_scr[...] = jnp.zeros_like(c_scr)

        t0 = pl.multiple_of(tc * t_chunk, t_chunk)

        # Layer 0 input comes from the streamed x chunk; deeper layers consume
        # the previous layer's hidden sequence already sitting in VMEM scratch.
        @pl.when(l == 0)
        def _():
            seq_scr[pl.ds(t0, t_chunk)] = x_ref[...].astype(jnp.float32)

        chunk_in = seq_scr[pl.ds(t0, t_chunk)]              # (t_chunk, Bp, Pmax)

        w_ih_t = w_ih_ref[0]                                # (Pmax, 4Hp)
        w_hh_t = w_hh_ref[0]                                # (Hp, 4Hp)
        bias = b_ref[0]                                     # (1, 4Hp) f32

        # Hoisted input projection: one well-shaped matmul per chunk, bias
        # folded in once (not re-broadcast inside the recurrence).
        lhs = chunk_in.reshape(t_chunk * Bp, Pmax).astype(w_ih_t.dtype)
        gates_x = (jnp.dot(lhs, w_ih_t, preferred_element_type=jnp.float32)
                   + bias).reshape(t_chunk, Bp, 4 * Hp)

        h = h_scr[...]
        c = c_scr[...]
        # t_chunk is small & static -> full unroll (the recurrence is serial
        # through h/c; chunking bounds code size and vreg live ranges).
        for t in range(t_chunk):
            gates = gates_x[t] + jnp.dot(h.astype(w_hh_t.dtype), w_hh_t,
                                         preferred_element_type=jnp.float32)
            # Gate order [i, f, o, g]: one tanh-form sigmoid over the
            # lane-aligned (Bp, 3Hp) slab + one tanh over (Bp, Hp).
            ifo = 0.5 * jnp.tanh(0.5 * gates[:, :3 * Hp]) + 0.5
            g = jnp.tanh(gates[:, 3 * Hp:])
            i_g = ifo[:, 0 * Hp:1 * Hp]
            f_g = ifo[:, 1 * Hp:2 * Hp]
            o_g = ifo[:, 2 * Hp:3 * Hp]
            c = f_g * c + i_g * g
            h = o_g * jnp.tanh(c)
            # Write this timestep's hidden state back in place; it becomes the
            # next layer's input chunk.
            if Pmax > Hp:
                h_store = jnp.concatenate(
                    [h, jnp.zeros((Bp, Pmax - Hp), jnp.float32)], axis=-1)
            else:
                h_store = h
            seq_scr[t0 + t] = h_store

        # Persist the recurrent carry for the next time chunk.
        h_scr[...] = h
        c_scr[...] = c

        # FC head on the final hidden state (dropout is identity in eval mode).
        @pl.when(last)
        def _():
            fc_w = fc_w_ref[...]
            out_ref[...] = (jnp.dot(h.astype(fc_w.dtype), fc_w,
                                    preferred_element_type=jnp.float32)
                            + fc_b_ref[...])

    return kernel


# ------------------------- parameter prep (one-time) -------------------------

def prepare_params(params, compute_dtype=jnp.bfloat16):
    """Reorder gates to [i,f,o,g], zero-pad to vreg tiles, pre-transpose,
    pre-sum biases, and STACK per-layer weights along a leading layer axis so
    the kernel streams one layer's weights at a time.

    compute_dtype controls MXU operand dtype only (bf16 default: ~3x MXU
    throughput on v6e/v7x, half the weight bytes); all gate/cell elementwise
    math stays f32 inside the kernel (required on v5e)."""
    E = params["embedding"].shape[1]
    H = params["lstm"][0]["w_hh"].shape[1]
    O = params["fc_w"].shape[0]
    Ep, Hp, Op = _round_up(E, LANE), _round_up(H, LANE), _round_up(O, LANE)
    Pmax = max(Ep, Hp)   # shared padded input width for all layers

    def pack_gate_mat(w, in_dim, in_pad):
        # w: (4H, in_dim) in PyTorch gate order [i, f, g, o] -> [i, f, o, g].
        blocks = [w[k * H:(k + 1) * H] for k in (0, 1, 3, 2)]
        blocks = [jnp.pad(blk, ((0, Hp - H), (0, in_pad - in_dim)))
                  for blk in blocks]
        return jnp.transpose(jnp.concatenate(blocks, axis=0)).astype(compute_dtype)

    def pack_gate_bias(bias):
        blocks = [bias[k * H:(k + 1) * H] for k in (0, 1, 3, 2)]
        blocks = [jnp.pad(blk, (0, Hp - H)) for blk in blocks]
        return jnp.concatenate(blocks)[None, :].astype(jnp.float32)   # (1, 4Hp)

    w_ih_l, w_hh_l, b_l = [], [], []
    for l, lp in enumerate(params["lstm"]):
        in_dim = E if l == 0 else H
        w_ih_l.append(pack_gate_mat(lp["w_ih"], in_dim, Pmax))        # (Pmax,4Hp)
        w_hh_l.append(pack_gate_mat(lp["w_hh"], H, Hp))               # (Hp, 4Hp)
        b_l.append(pack_gate_bias(lp["b_ih"] + lp["b_hh"]))           # (1, 4Hp)

    return {
        "embedding": jnp.pad(params["embedding"],
                             ((0, 0), (0, Pmax - E))).astype(compute_dtype),
        "w_ih_t": jnp.stack(w_ih_l),                                  # (L,Pmax,4Hp)
        "w_hh_t": jnp.stack(w_hh_l),                                  # (L,Hp,4Hp)
        "b": jnp.stack(b_l),                                          # (L,1,4Hp)
        "fc_w_t": jnp.transpose(
            jnp.pad(params["fc_w"], ((0, Op - O), (0, Hp - H)))
        ).astype(compute_dtype),                                      # (Hp, Op)
        "fc_b": jnp.pad(params["fc_b"], (0, Op - O))[None, :].astype(jnp.float32),
    }


# ------------------------------ forward wrapper -------------------------------

def lstm_model_forward(x_ids, prepped, *, output_size, max_time_chunk=8):
    """x_ids: (B, T) int32 token ids; prepped from prepare_params()."""
    L, Pmax, H4 = prepped["w_ih_t"].shape
    Hp = H4 // 4
    Op = prepped["fc_w_t"].shape[1]
    B, T = x_ids.shape
    Bp = _round_up(B, SUBLANE)
    t_chunk = _pick_time_chunk(T, max_time_chunk)
    n_chunks = T // t_chunk

    # Embedding gather + time-major + batch pad (plain-JAX glue).
    emb = prepped["embedding"][x_ids]                       # (B, T, Pmax)
    x_tbe = jnp.transpose(emb, (1, 0, 2))                   # (T, B, Pmax)
    x_tbe = jnp.pad(x_tbe, ((0, 0), (0, Bp - B), (0, 0)))   # (T, Bp, Pmax)

    cdt = prepped["w_ih_t"].dtype
    dtb = jnp.dtype(cdt).itemsize

    # VMEM footprint: double-buffered streamed blocks + persistent scratch
    # + the per-chunk gates_x value; headroom added, capped below physical.
    block_bytes = 2 * (t_chunk * Bp * Pmax * dtb            # x chunk
                       + Pmax * 4 * Hp * dtb                # w_ih layer slice
                       + Hp * 4 * Hp * dtb                  # w_hh layer slice
                       + 4 * Hp * 4                         # bias
                       + Hp * Op * dtb + Op * 4             # fc
                       + Bp * Op * 4)                       # out
    scratch_bytes = (T * Bp * Pmax + 2 * Bp * Hp) * 4
    value_bytes = t_chunk * Bp * 4 * Hp * 4                 # gates_x chunk
    footprint = block_bytes + scratch_bytes + value_bytes
    try:
        vmem_cap = pltpu.get_tpu_info().vmem_capacity_bytes
    except Exception:
        vmem_cap = 64 * 1024 * 1024                         # v7x per-TC floor
    vmem_limit = int(min(max(2 * footprint, 16 << 20) + (4 << 20),
                         vmem_cap - (8 << 20)))

    # Advisory cost estimate for XLA scheduling around the custom call.
    flops = L * (2 * T * Bp * Pmax * 4 * Hp + 2 * T * Bp * Hp * 4 * Hp) \
        + 2 * Bp * Hp * Op
    transcendentals = L * T * Bp * 5 * Hp
    bytes_accessed = (x_tbe.size * dtb
                      + prepped["w_ih_t"].size * dtb + prepped["w_hh_t"].size * dtb
                      + prepped["b"].size * 4
                      + prepped["fc_w_t"].size * dtb + prepped["fc_b"].size * 4
                      + Bp * Op * 4)

    grid_spec = pltpu.PrefetchScalarGridSpec(
        num_scalar_prefetch=0,
        grid=(L, n_chunks),
        in_specs=[
            # Time-streamed input (double-buffered DMA overlaps the chunk's
            # input projection).  Layers > 0 pin block 0 -> no re-fetch of x.
            pl.BlockSpec((t_chunk, Bp, Pmax),
                         lambda l, tc: (jnp.where(l == 0, tc, 0), 0, 0)),
            # Per-layer weight streaming: only one layer's weights resident.
            pl.BlockSpec((1, Pmax, 4 * Hp), lambda l, tc: (l, 0, 0)),
            pl.BlockSpec((1, Hp, 4 * Hp), lambda l, tc: (l, 0, 0)),
            pl.BlockSpec((1, 1, 4 * Hp), lambda l, tc: (l, 0, 0)),
            pl.BlockSpec((Hp, Op), lambda l, tc: (0, 0)),
            pl.BlockSpec((1, Op), lambda l, tc: (0, 0)),
        ],
        out_specs=pl.BlockSpec((Bp, Op), lambda l, tc: (0, 0)),
        scratch_shapes=[
            pltpu.VMEM((T, Bp, Pmax), jnp.float32),   # inter-layer hidden seq
            pltpu.VMEM((Bp, Hp), jnp.float32),        # h carry across chunks
            pltpu.VMEM((Bp, Hp), jnp.float32),        # c carry across chunks
        ],
    )

    out = pl.pallas_call(
        _make_kernel(t_chunk, Bp, Pmax, Hp),
        out_shape=jax.ShapeDtypeStruct((Bp, Op), jnp.float32),
        grid_spec=grid_spec,
        compiler_params=pltpu.CompilerParams(
            dimension_semantics=("arbitrary", "arbitrary"),
            vmem_limit_bytes=vmem_limit),
        cost_estimate=pl.CostEstimate(flops=flops,
                                      transcendentals=transcendentals,
                                      bytes_accessed=bytes_accessed),
    )(x_tbe, prepped["w_ih_t"], prepped["w_hh_t"], prepped["b"],
      prepped["fc_w_t"], prepped["fc_b"])
    return out[:B, :output_size]


# ------------------------- pure-JAX reference check ---------------------------

def lstm_model_ref(x_ids, params):
    emb = params["embedding"][x_ids]                        # (B, T, E)
    B, T, _ = emb.shape
    h_seq = emb
    h_last = None
    for lp in params["lstm"]:
        H = lp["w_hh"].shape[1]
        h = jnp.zeros((B, H), jnp.float32)
        c = jnp.zeros((B, H), jnp.float32)
        outs = []
        for t in range(T):
            gates = (h_seq[:, t, :] @ lp["w_ih"].T + lp["b_ih"]
                     + h @ lp["w_hh"].T + lp["b_hh"])
            i = jax.nn.sigmoid(gates[:, 0 * H:1 * H])
            f = jax.nn.sigmoid(gates[:, 1 * H:2 * H])
            g = jnp.tanh(gates[:, 2 * H:3 * H])
            o = jax.nn.sigmoid(gates[:, 3 * H:4 * H])
            c = f * c + i * g
            h = o * jnp.tanh(c)
            outs.append(h)
        h_seq = jnp.stack(outs, axis=1)
        h_last = h
    return h_last @ params["fc_w"].T + params["fc_b"]


# ---------------------------------- main --------------------------------------

def init_params(key, vocab_size, embed_size, hidden_size, output_size, num_layers):
    keys = jax.random.split(key, 3 + 4 * num_layers)
    scale = 1.0 / jnp.sqrt(hidden_size)
    params = {
        "embedding": jax.random.normal(keys[0], (vocab_size, embed_size),
                                       jnp.float32) * 0.1,
        "fc_w": jax.random.uniform(keys[1], (output_size, hidden_size),
                                   jnp.float32, -scale, scale),
        "fc_b": jax.random.uniform(keys[2], (output_size,),
                                   jnp.float32, -scale, scale),
        "lstm": [],
    }
    for l in range(num_layers):
        in_size = embed_size if l == 0 else hidden_size
        k = keys[3 + 4 * l: 3 + 4 * (l + 1)]
        params["lstm"].append({
            "w_ih": jax.random.uniform(k[0], (4 * hidden_size, in_size),
                                       jnp.float32, -scale, scale),
            "w_hh": jax.random.uniform(k[1], (4 * hidden_size, hidden_size),
                                       jnp.float32, -scale, scale),
            "b_ih": jax.random.uniform(k[2], (4 * hidden_size,),
                                       jnp.float32, -scale, scale),
            "b_hh": jax.random.uniform(k[3], (4 * hidden_size,),
                                       jnp.float32, -scale, scale),
        })
    return params


if __name__ == "__main__":
    vocab_size, embed_size, hidden_size, output_size, num_layers = 32, 16, 32, 10, 2
    B, T = 2, 8

    key = jax.random.PRNGKey(0)
    k_param, k_in = jax.random.split(key)
    params = init_params(k_param, vocab_size, embed_size, hidden_size,
                         output_size, num_layers)
    x_ids = jax.random.randint(k_in, (B, T), 0, vocab_size, dtype=jnp.int32)

    ref = lstm_model_ref(x_ids, params)

    # max_time_chunk=4 -> grid (layers=2, chunks=2): exercises the per-layer
    # weight streaming and the h/c carry across time chunks at this tiny T.
    fwd = jax.jit(functools.partial(lstm_model_forward, output_size=output_size,
                                    max_time_chunk=4))

    # f32 MXU operands: tight check against the f32 reference.
    prepped_f32 = prepare_params(params, compute_dtype=jnp.float32)
    out_f32 = jax.block_until_ready(fwd(x_ids, prepped_f32))
    assert out_f32.shape == (B, output_size)
    assert jnp.allclose(out_f32, ref, atol=1e-4, rtol=1e-4), "f32 mismatch vs reference"

    # bf16 MXU operands (default; recommended on v5e/v6e/v7x): looser check.
    prepped_bf16 = prepare_params(params)   # compute_dtype=jnp.bfloat16
    out_bf16 = jax.block_until_ready(fwd(x_ids, prepped_bf16))
    assert out_bf16.shape == (B, output_size)
    assert jnp.allclose(out_bf16, ref, atol=5e-2, rtol=5e-2), "bf16 mismatch vs reference"

    print("KERNEL_OK")
</pallas_src>

<mosaic_0001>
module attributes {stable_mosaic.version = 11 : i64} {
  func.func @kernel(%arg0: i32, %arg1: i32, %arg2: memref<4x8x128xf32, #tpu.memory_space<vmem>>, %arg3: memref<1x128x512xf32, #tpu.memory_space<vmem>>, %arg4: memref<1x128x512xf32, #tpu.memory_space<vmem>>, %arg5: memref<1x1x512xf32, #tpu.memory_space<vmem>>, %arg6: memref<128x128xf32, #tpu.memory_space<vmem>>, %arg7: memref<1x128xf32, #tpu.memory_space<vmem>>, %arg8: memref<8x128xf32, #tpu.memory_space<vmem>>, %arg9: memref<8x8x128xf32, #tpu.memory_space<vmem>>, %arg10: memref<8x128xf32, #tpu.memory_space<vmem>>, %arg11: memref<8x128xf32, #tpu.memory_space<vmem>>) attributes {dimension_semantics = [#tpu.dimension_semantics<arbitrary>, #tpu.dimension_semantics<arbitrary>], iteration_bounds = array<i64: 2, 2>, scalar_prefetch = 0 : i64, scratch_operands = 3 : i64, tpu.core_type = #tpu.core_type<tc>, window_params = [{transform_indices = @transform_0, window_bounds = array<i64: 4, 8, 128>}, {transform_indices = @transform_1, window_bounds = array<i64: 1, 128, 512>}, {transform_indices = @transform_2, window_bounds = array<i64: 1, 128, 512>}, {transform_indices = @transform_3, window_bounds = array<i64: 1, 1, 512>}, {pipeline_mode = #tpu.pipeline_mode<synchronous>, transform_indices = @transform_4, window_bounds = array<i64: 128, 128>}, {pipeline_mode = #tpu.pipeline_mode<synchronous>, transform_indices = @transform_5, window_bounds = array<i64: 1, 128>}, {pipeline_mode = #tpu.pipeline_mode<synchronous>, transform_indices = @transform_6, window_bounds = array<i64: 8, 128>}]} {
    %c1_i32 = arith.constant 1 : i32
    %0 = arith.cmpi eq, %arg0, %c1_i32 : i32
    %c1_i32_0 = arith.constant 1 : i32
    %1 = arith.cmpi eq, %arg1, %c1_i32_0 : i32
    %2 = arith.andi %0, %1 : i1
    %c0_i32 = arith.constant 0 : i32
    %3 = arith.cmpi eq, %arg1, %c0_i32 : i32
    %4 = arith.extui %3 : i1 to i32
    %c0_i32_1 = arith.constant 0 : i32
    %5 = arith.cmpi ne, %4, %c0_i32_1 : i32
    scf.if %5 {
      %cst_49 = arith.constant 0.000000e+00 : f32
      %138 = vector.broadcast %cst_49 : f32 to vector<8x128xf32>
      %c0_50 = arith.constant 0 : index
      %c0_51 = arith.constant 0 : index
      %139 = vector.load %arg10[%c0_50, %c0_51] : memref<8x128xf32, #tpu.memory_space<vmem>>, vector<8x128xf32>
      tpu.vector_store %arg10[%c0_50, %c0_51], %138 {strides = array<i32>} : memref<8x128xf32, #tpu.memory_space<vmem>>, vector<8x128xf32>,
      %cst_52 = arith.constant 0.000000e+00 : f32
      %140 = vector.broadcast %cst_52 : f32 to vector<8x128xf32>
      %c0_53 = arith.constant 0 : index
      %c0_54 = arith.constant 0 : index
      %141 = vector.load %arg11[%c0_53, %c0_54] : memref<8x128xf32, #tpu.memory_space<vmem>>, vector<8x128xf32>
      tpu.vector_store %arg11[%c0_53, %c0_54], %140 {strides = array<i32>} : memref<8x128xf32, #tpu.memory_space<vmem>>, vector<8x128xf32>,
    } else {
    }
    %c4_i32 = arith.constant 4 : i32
    %6 = arith.muli %arg1, %c4_i32 : i32
    %7 = tpu.assume_multiple %6, 4 : i32
    %c0_i32_2 = arith.constant 0 : i32
    %8 = arith.cmpi eq, %arg0, %c0_i32_2 : i32
    %9 = arith.extui %8 : i1 to i32
    %c0_i32_3 = arith.constant 0 : i32
    %10 = arith.cmpi ne, %9, %c0_i32_3 : i32
    scf.if %10 {
      %c0_49 = arith.constant 0 : index
      %c0_50 = arith.constant 0 : index
      %c0_51 = arith.constant 0 : index
      %138 = vector.load %arg2[%c0_49, %c0_50, %c0_51] : memref<4x8x128xf32, #tpu.memory_space<vmem>>, vector<4x8x128xf32>
      %139 = arith.index_cast %7 : i32 to index
      %c0_52 = arith.constant 0 : index
      %c0_53 = arith.constant 0 : index
      %140 = vector.load %arg9[%139, %c0_52, %c0_53] : memref<8x8x128xf32, #tpu.memory_space<vmem>>, vector<4x8x128xf32>
      tpu.vector_store %arg9[%139, %c0_52, %c0_53], %138 {strides = array<i32>} : memref<8x8x128xf32, #tpu.memory_space<vmem>>, vector<4x8x128xf32>,
    } else {
    }
    %11 = arith.index_cast %7 : i32 to index
    %c0 = arith.constant 0 : index
    %c0_4 = arith.constant 0 : index
    %12 = vector.load %arg9[%11, %c0, %c0_4] : memref<8x8x128xf32, #tpu.memory_space<vmem>>, vector<4x8x128xf32>
    %c0_5 = arith.constant 0 : index
    %c0_6 = arith.constant 0 : index
    %c0_7 = arith.constant 0 : index
    %13 = vector.load %arg3[%c0_5, %c0_6, %c0_7] : memref<1x128x512xf32, #tpu.memory_space<vmem>>, vector<1x128x512xf32>
    %14 = vector.shape_cast %13 : vector<1x128x512xf32> to vector<128x512xf32>
    %c0_8 = arith.constant 0 : index
    %c0_9 = arith.constant 0 : index
    %c0_10 = arith.constant 0 : index
    %15 = vector.load %arg4[%c0_8, %c0_9, %c0_10] : memref<1x128x512xf32, #tpu.memory_space<vmem>>, vector<1x128x512xf32>
    %16 = vector.shape_cast %15 : vector<1x128x512xf32> to vector<128x512xf32>
    %c0_11 = arith.constant 0 : index
    %c0_12 = arith.constant 0 : index
    %c0_13 = arith.constant 0 : index
    %17 = vector.load %arg5[%c0_11, %c0_12, %c0_13] : memref<1x1x512xf32, #tpu.memory_space<vmem>>, vector<1x1x512xf32>
    %18 = vector.shape_cast %17 : vector<1x1x512xf32> to vector<1x512xf32>
    %19 = vector.shape_cast %12 : vector<4x8x128xf32> to vector<32x128xf32>
    %cst = arith.constant dense<0.000000e+00> : vector<32x512xf32>
    %20 = tpu.matmul %19, %14, %cst {dimension_numbers = #tpu.dot_dimension_numbers<[1], [0], [0], [1], [0, 0, 1, 1], [], []>} : vector<32x128xf32>, vector<128x512xf32>, vector<32x512xf32> -> vector<32x512xf32>
    %21 = vector.broadcast %18 : vector<1x512xf32> to vector<32x512xf32>
    %22 = arith.addf %20, %21 : vector<32x512xf32>
    %23 = vector.shape_cast %22 : vector<32x512xf32> to vector<4x8x512xf32>
    %c0_14 = arith.constant 0 : index
    %c0_15 = arith.constant 0 : index
    %24 = vector.load %arg10[%c0_14, %c0_15] : memref<8x128xf32, #tpu.memory_space<vmem>>, vector<8x128xf32>
    %c0_16 = arith.constant 0 : index
    %c0_17 = arith.constant 0 : index
    %25 = vector.load %arg11[%c0_16, %c0_17] : memref<8x128xf32, #tpu.memory_space<vmem>>, vector<8x128xf32>
    %26 = vector.extract_strided_slice %23 {offsets = [0, 0, 0], sizes = [1, 8, 512], strides = [1, 1, 1]} : vector<4x8x512xf32> to vector<1x8x512xf32>
    %27 = vector.shape_cast %26 : vector<1x8x512xf32> to vector<8x512xf32>
    %cst_18 = arith.constant dense<0.000000e+00> : vector<8x512xf32>
    %28 = tpu.matmul %24, %16, %cst_18 {dimension_numbers = #tpu.dot_dimension_numbers<[1], [0], [0], [1], [0, 0, 1, 1], [], []>} : vector<8x128xf32>, vector<128x512xf32>, vector<8x512xf32> -> vector<8x512xf32>
    %29 = arith.addf %27, %28 : vector<8x512xf32>
    %30 = vector.extract_strided_slice %29 {offsets = [0, 0], sizes = [8, 384], strides = [1, 1]} : vector<8x512xf32> to vector<8x384xf32>
    %cst_19 = arith.constant 5.000000e-01 : f32
    %31 = vector.broadcast %cst_19 : f32 to vector<8x384xf32>
    %32 = arith.mulf %31, %30 : vector<8x384xf32>
    %33 = math.tanh %32 : vector<8x384xf32>
    %cst_20 = arith.constant 5.000000e-01 : f32
    %34 = vector.broadcast %cst_20 : f32 to vector<8x384xf32>
    %35 = arith.mulf %34, %33 : vector<8x384xf32>
    %cst_21 = arith.constant 5.000000e-01 : f32
    %36 = vector.broadcast %cst_21 : f32 to vector<8x384xf32>
    %37 = arith.addf %35, %36 : vector<8x384xf32>
    %38 = vector.extract_strided_slice %29 {offsets = [0, 384], sizes = [8, 128], strides = [1, 1]} : vector<8x512xf32> to vector<8x128xf32>
    %39 = math.tanh %38 : vector<8x128xf32>
    %40 = vector.extract_strided_slice %37 {offsets = [0, 0], sizes = [8, 128], strides = [1, 1]} : vector<8x384xf32> to vector<8x128xf32>
    %41 = vector.extract_strided_slice %37 {offsets = [0, 128], sizes = [8, 128], strides = [1, 1]} : vector<8x384xf32> to vector<8x128xf32>
    %42 = vector.extract_strided_slice %37 {offsets = [0, 256], sizes = [8, 128], strides = [1, 1]} : vector<8x384xf32> to vector<8x128xf32>
    %43 = arith.mulf %41, %25 : vector<8x128xf32>
    %44 = arith.mulf %40, %39 : vector<8x128xf32>
    %45 = arith.addf %43, %44 : vector<8x128xf32>
    %46 = math.tanh %45 : vector<8x128xf32>
    %47 = arith.mulf %42, %46 : vector<8x128xf32>
    %c0_i32_22 = arith.constant 0 : i32
    %48 = arith.addi %7, %c0_i32_22 : i32
    %49 = arith.index_cast %48 : i32 to index
    %c0_23 = arith.constant 0 : index
    %c0_24 = arith.constant 0 : index
    %50 = vector.load %arg9[%49, %c0_23, %c0_24] : memref<8x8x128xf32, #tpu.memory_space<vmem>>, vector<1x8x128xf32>
    %51 = vector.shape_cast %50 : vector<1x8x128xf32> to vector<8x128xf32>
    %52 = vector.shape_cast %47 : vector<8x128xf32> to vector<1x8x128xf32>
    tpu.vector_store %arg9[%49, %c0_23, %c0_24], %52 {strides = array<i32>} : memref<8x8x128xf32, #tpu.memory_space<vmem>>, vector<1x8x128xf32>,
    %53 = vector.extract_strided_slice %23 {offsets = [1, 0, 0], sizes = [1, 8, 512], strides = [1, 1, 1]} : vector<4x8x512xf32> to vector<1x8x512xf32>
    %54 = vector.shape_cast %53 : vector<1x8x512xf32> to vector<8x512xf32>
    %cst_25 = arith.constant dense<0.000000e+00> : vector<8x512xf32>
    %55 = tpu.matmul %47, %16, %cst_25 {dimension_numbers = #tpu.dot_dimension_numbers<[1], [0], [0], [1], [0, 0, 1, 1], [], []>} : vector<8x128xf32>, vector<128x512xf32>, vector<8x512xf32> -> vector<8x512xf32>
    %56 = arith.addf %54, %55 : vector<8x512xf32>
    %57 = vector.extract_strided_slice %56 {offsets = [0, 0], sizes = [8, 384], strides = [1, 1]} : vector<8x512xf32> to vector<8x384xf32>
    %cst_26 = arith.constant 5.000000e-01 : f32
    %58 = vector.broadcast %cst_26 : f32 to vector<8x384xf32>
    %59 = arith.mulf %58, %57 : vector<8x384xf32>
    %60 = math.tanh %59 : vector<8x384xf32>
    %cst_27 = arith.constant 5.000000e-01 : f32
    %61 = vector.broadcast %cst_27 : f32 to vector<8x384xf32>
    %62 = arith.mulf %61, %60 : vector<8x384xf32>
    %cst_28 = arith.constant 5.000000e-01 : f32
    %63 = vector.broadcast %cst_28 : f32 to vector<8x384xf32>
    %64 = arith.addf %62, %63 : vector<8x384xf32>
    %65 = vector.extract_strided_slice %56 {offsets = [0, 384], sizes = [8, 128], strides = [1, 1]} : vector<8x512xf32> to vector<8x128xf32>
    %66 = math.tanh %65 : vector<8x128xf32>
    %67 = vector.extract_strided_slice %64 {offsets = [0, 0], sizes = [8, 128], strides = [1, 1]} : vector<8x384xf32> to vector<8x128xf32>
    %68 = vector.extract_strided_slice %64 {offsets = [0, 128], sizes = [8, 128], strides = [1, 1]} : vector<8x384xf32> to vector<8x128xf32>
    %69 = vector.extract_strided_slice %64 {offsets = [0, 256], sizes = [8, 128], strides = [1, 1]} : vector<8x384xf32> to vector<8x128xf32>
    %70 = arith.mulf %68, %45 : vector<8x128xf32>
    %71 = arith.mulf %67, %66 : vector<8x128xf32>
    %72 = arith.addf %70, %71 : vector<8x128xf32>
    %73 = math.tanh %72 : vector<8x128xf32>
    %74 = arith.mulf %69, %73 : vector<8x128xf32>
    %c1_i32_29 = arith.constant 1 : i32
    %75 = arith.addi %7, %c1_i32_29 : i32
    %76 = arith.index_cast %75 : i32 to index
    %c0_30 = arith.constant 0 : index
    %c0_31 = arith.constant 0 : index
    %77 = vector.load %arg9[%76, %c0_30, %c0_31] : memref<8x8x128xf32, #tpu.memory_space<vmem>>, vector<1x8x128xf32>
    %78 = vector.shape_cast %77 : vector<1x8x128xf32> to vector<8x128xf32>
    %79 = vector.shape_cast %74 : vector<8x128xf32> to vector<1x8x128xf32>
    tpu.vector_store %arg9[%76, %c0_30, %c0_31], %79 {strides = array<i32>} : memref<8x8x128xf32, #tpu.memory_space<vmem>>, vector<1x8x128xf32>,
    %80 = vector.extract_strided_slice %23 {offsets = [2, 0, 0], sizes = [1, 8, 512], strides = [1, 1, 1]} : vector<4x8x512xf32> to vector<1x8x512xf32>
    %81 = vector.shape_cast %80 : vector<1x8x512xf32> to vector<8x512xf32>
    %cst_32 = arith.constant dense<0.000000e+00> : vector<8x512xf32>
    %82 = tpu.matmul %74, %16, %cst_32 {dimension_numbers = #tpu.dot_dimension_numbers<[1], [0], [0], [1], [0, 0, 1, 1], [], []>} : vector<8x128xf32>, vector<128x512xf32>, vector<8x512xf32> -> vector<8x512xf32>
    %83 = arith.addf %81, %82 : vector<8x512xf32>
    %84 = vector.extract_strided_slice %83 {offsets = [0, 0], sizes = [8, 384], strides = [1, 1]} : vector<8x512xf32> to vector<8x384xf32>
    %cst_33 = arith.constant 5.000000e-01 : f32
    %85 = vector.broadcast %cst_33 : f32 to vector<8x384xf32>
    %86 = arith.mulf %85, %84 : vector<8x384xf32>
    %87 = math.tanh %86 : vector<8x384xf32>
    %cst_34 = arith.constant 5.000000e-01 : f32
    %88 = vector.broadcast %cst_34 : f32 to vector<8x384xf32>
    %89 = arith.mulf %88, %87 : vector<8x384xf32>
    %cst_35 = arith.constant 5.000000e-01 : f32
    %90 = vector.broadcast %cst_35 : f32 to vector<8x384xf32>
    %91 = arith.addf %89, %90 : vector<8x384xf32>
    %92 = vector.extract_strided_slice %83 {offsets = [0, 384], sizes = [8, 128], strides = [1, 1]} : vector<8x512xf32> to vector<8x128xf32>
    %93 = math.tanh %92 : vector<8x128xf32>
    %94 = vector.extract_strided_slice %91 {offsets = [0, 0], sizes = [8, 128], strides = [1, 1]} : vector<8x384xf32> to vector<8x128xf32>
    %95 = vector.extract_strided_slice %91 {offsets = [0, 128], sizes = [8, 128], strides = [1, 1]} : vector<8x384xf32> to vector<8x128xf32>
    %96 = vector.extract_strided_slice %91 {offsets = [0, 256], sizes = [8, 128], strides = [1, 1]} : vector<8x384xf32> to vector<8x128xf32>
    %97 = arith.mulf %95, %72 : vector<8x128xf32>
    %98 = arith.mulf %94, %93 : vector<8x128xf32>
    %99 = arith.addf %97, %98 : vector<8x128xf32>
    %100 = math.tanh %99 : vector<8x128xf32>
    %101 = arith.mulf %96, %100 : vector<8x128xf32>
    %c2_i32 = arith.constant 2 : i32
    %102 = arith.addi %7, %c2_i32 : i32
    %103 = arith.index_cast %102 : i32 to index
    %c0_36 = arith.constant 0 : index
    %c0_37 = arith.constant 0 : index
    %104 = vector.load %arg9[%103, %c0_36, %c0_37] : memref<8x8x128xf32, #tpu.memory_space<vmem>>, vector<1x8x128xf32>
    %105 = vector.shape_cast %104 : vector<1x8x128xf32> to vector<8x128xf32>
    %106 = vector.shape_cast %101 : vector<8x128xf32> to vector<1x8x128xf32>
    tpu.vector_store %arg9[%103, %c0_36, %c0_37], %106 {strides = array<i32>} : memref<8x8x128xf32, #tpu.memory_space<vmem>>, vector<1x8x128xf32>,
    %107 = vector.extract_strided_slice %23 {offsets = [3, 0, 0], sizes = [1, 8, 512], strides = [1, 1, 1]} : vector<4x8x512xf32> to vector<1x8x512xf32>
    %108 = vector.shape_cast %107 : vector<1x8x512xf32> to vector<8x512xf32>
    %cst_38 = arith.constant dense<0.000000e+00> : vector<8x512xf32>
    %109 = tpu.matmul %101, %16, %cst_38 {dimension_numbers = #tpu.dot_dimension_numbers<[1], [0], [0], [1], [0, 0, 1, 1], [], []>} : vector<8x128xf32>, vector<128x512xf32>, vector<8x512xf32> -> vector<8x512xf32>
    %110 = arith.addf %108, %109 : vector<8x512xf32>
    %111 = vector.extract_strided_slice %110 {offsets = [0, 0], sizes = [8, 384], strides = [1, 1]} : vector<8x512xf32> to vector<8x384xf32>
    %cst_39 = arith.constant 5.000000e-01 : f32
    %112 = vector.broadcast %cst_39 : f32 to vector<8x384xf32>
    %113 = arith.mulf %112, %111 : vector<8x384xf32>
    %114 = math.tanh %113 : vector<8x384xf32>
    %cst_40 = arith.constant 5.000000e-01 : f32
    %115 = vector.broadcast %cst_40 : f32 to vector<8x384xf32>
    %116 = arith.mulf %115, %114 : vector<8x384xf32>
    %cst_41 = arith.constant 5.000000e-01 : f32
    %117 = vector.broadcast %cst_41 : f32 to vector<8x384xf32>
    %118 = arith.addf %116, %117 : vector<8x384xf32>
    %119 = vector.extract_strided_slice %110 {offsets = [0, 384], sizes = [8, 128], strides = [1, 1]} : vector<8x512xf32> to vector<8x128xf32>
    %120 = math.tanh %119 : vector<8x128xf32>
    %121 = vector.extract_strided_slice %118 {offsets = [0, 0], sizes = [8, 128], strides = [1, 1]} : vector<8x384xf32> to vector<8x128xf32>
    %122 = vector.extract_strided_slice %118 {offsets = [0, 128], sizes = [8, 128], strides = [1, 1]} : vector<8x384xf32> to vector<8x128xf32>
    %123 = vector.extract_strided_slice %118 {offsets = [0, 256], sizes = [8, 128], strides = [1, 1]} : vector<8x384xf32> to vector<8x128xf32>
    %124 = arith.mulf %122, %99 : vector<8x128xf32>
    %125 = arith.mulf %121, %120 : vector<8x128xf32>
    %126 = arith.addf %124, %125 : vector<8x128xf32>
    %127 = math.tanh %126 : vector<8x128xf32>
    %128 = arith.mulf %123, %127 : vector<8x128xf32>
    %c3_i32 = arith.constant 3 : i32
    %129 = arith.addi %7, %c3_i32 : i32
    %130 = arith.index_cast %129 : i32 to index
    %c0_42 = arith.constant 0 : index
    %c0_43 = arith.constant 0 : index
    %131 = vector.load %arg9[%130, %c0_42, %c0_43] : memref<8x8x128xf32, #tpu.memory_space<vmem>>, vector<1x8x128xf32>
    %132 = vector.shape_cast %131 : vector<1x8x128xf32> to vector<8x128xf32>
    %133 = vector.shape_cast %128 : vector<8x128xf32> to vector<1x8x128xf32>
    tpu.vector_store %arg9[%130, %c0_42, %c0_43], %133 {strides = array<i32>} : memref<8x8x128xf32, #tpu.memory_space<vmem>>, vector<1x8x128xf32>,
    %c0_44 = arith.constant 0 : index
    %c0_45 = arith.constant 0 : index
    %134 = vector.load %arg10[%c0_44, %c0_45] : memref<8x128xf32, #tpu.memory_space<vmem>>, vector<8x128xf32>
    tpu.vector_store %arg10[%c0_44, %c0_45], %128 {strides = array<i32>} : memref<8x128xf32, #tpu.memory_space<vmem>>, vector<8x128xf32>,
    %c0_46 = arith.constant 0 : index
    %c0_47 = arith.constant 0 : index
    %135 = vector.load %arg11[%c0_46, %c0_47] : memref<8x128xf32, #tpu.memory_space<vmem>>, vector<8x128xf32>
    tpu.vector_store %arg11[%c0_46, %c0_47], %126 {strides = array<i32>} : memref<8x128xf32, #tpu.memory_space<vmem>>, vector<8x128xf32>,
    %136 = arith.extui %2 : i1 to i32
    %c0_i32_48 = arith.constant 0 : i32
    %137 = arith.cmpi ne, %136, %c0_i32_48 : i32
    scf.if %137 {
      %c0_49 = arith.constant 0 : index
      %c0_50 = arith.constant 0 : index
      %138 = vector.load %arg6[%c0_49, %c0_50] : memref<128x128xf32, #tpu.memory_space<vmem>>, vector<128x128xf32>
      %cst_51 = arith.constant dense<0.000000e+00> : vector<8x128xf32>
      %139 = tpu.matmul %128, %138, %cst_51 {dimension_numbers = #tpu.dot_dimension_numbers<[1], [0], [0], [1], [0, 0, 1, 1], [], []>} : vector<8x128xf32>, vector<128x128xf32>, vector<8x128xf32> -> vector<8x128xf32>
      %c0_52 = arith.constant 0 : index
      %c0_53 = arith.constant 0 : index
      %140 = vector.load %arg7[%c0_52, %c0_53] : memref<1x128xf32, #tpu.memory_space<vmem>>, vector<1x128xf32>
      %141 = vector.broadcast %140 : vector<1x128xf32> to vector<8x128xf32>
      %142 = arith.addf %139, %141 : vector<8x128xf32>
      %c0_54 = arith.constant 0 : index
      %c0_55 = arith.constant 0 : index
      %143 = vector.load %arg8[%c0_54, %c0_55] : memref<8x128xf32, #tpu.memory_space<vmem>>, vector<8x128xf32>
      tpu.vector_store %arg8[%c0_54, %c0_55], %142 {strides = array<i32>} : memref<8x128xf32, #tpu.memory_space<vmem>>, vector<8x128xf32>,
    } else {
    }
    return
  }
  func.func @transform_0(%arg0: i32, %arg1: i32) -> (i32, i32, i32) {
    %c0_i32 = arith.constant 0 : i32
    %0 = arith.cmpi eq, %arg0, %c0_i32 : i32
    %c0_i32_0 = arith.constant 0 : i32
    %1 = arith.select %0, %arg1, %c0_i32_0 : i32
    %c0_i32_1 = arith.constant 0 : i32
    %c0_i32_2 = arith.constant 0 : i32
    %c0_i32_3 = arith.constant 0 : i32
    return %1, %c0_i32_1, %c0_i32_2 : i32, i32, i32
  }
  func.func @transform_1(%arg0: i32, %arg1: i32) -> (i32, i32, i32) {
    %c0_i32 = arith.constant 0 : i32
    %c0_i32_0 = arith.constant 0 : i32
    %c0_i32_1 = arith.constant 0 : i32
    return %arg0, %c0_i32, %c0_i32_0 : i32, i32, i32
  }
  func.func @transform_2(%arg0: i32, %arg1: i32) -> (i32, i32, i32) {
    %c0_i32 = arith.constant 0 : i32
    %c0_i32_0 = arith.constant 0 : i32
    %c0_i32_1 = arith.constant 0 : i32
    return %arg0, %c0_i32, %c0_i32_0 : i32, i32, i32
  }
  func.func @transform_3(%arg0: i32, %arg1: i32) -> (i32, i32, i32) {
    %c0_i32 = arith.constant 0 : i32
    %c0_i32_0 = arith.constant 0 : i32
    %c0_i32_1 = arith.constant 0 : i32
    return %arg0, %c0_i32, %c0_i32_0 : i32, i32, i32
  }
  func.func @transform_4(%arg0: i32, %arg1: i32) -> (i32, i32) {
    %c0_i32 = arith.constant 0 : i32
    %c0_i32_0 = arith.constant 0 : i32
    %c0_i32_1 = arith.constant 0 : i32
    return %c0_i32, %c0_i32_0 : i32, i32
  }
  func.func @transform_5(%arg0: i32, %arg1: i32) -> (i32, i32) {
    %c0_i32 = arith.constant 0 : i32
    %c0_i32_0 = arith.constant 0 : i32
    %c0_i32_1 = arith.constant 0 : i32
    return %c0_i32, %c0_i32_0 : i32, i32
  }
  func.func @transform_6(%arg0: i32, %arg1: i32) -> (i32, i32) {
    %c0_i32 = arith.constant 0 : i32
    %c0_i32_0 = arith.constant 0 : i32
    %c0_i32_1 = arith.constant 0 : i32
    return %c0_i32, %c0_i32_0 : i32, i32
  }
}

</mosaic_0001>

<llo_original>
// kernel: lstm_model_forward.1
$region0: #{lstm_model_forward.1}
  #allocation0 [shape = 'u32[]', space=smem, size = 0x4, offset = 0x4, fixed_abs, tag = 'smem constant byte address 0x4 - core index']
  #allocation1 [shape = 'u32[144,128]{1,0:T(1,128)}', space=vmem, size = 0x12000, scoped, tag = 'internal scratch']
  #allocation2 [shape = 'f32[8,8,128]{2,1,0:T(8,128)}', space=vmem, size = 0x8000, scoped, tag = 'scratch operand']
  #allocation3 [shape = 'f32[8,128]{1,0:T(8,128)}', space=vmem, size = 0x1000, scoped, tag = 'scratch operand']
  #allocation4 [shape = 'f32[8,128]{1,0:T(8,128)}', space=vmem, size = 0x1000, scoped, tag = 'scratch operand']
  %s0 = inlined_call_operand.vmem [shape: f32[8,8,128], index: 0, kind: input, shape index: {}]
  %s1 = inlined_call_operand.hbm [shape: f32[2,128,512], index: 1, kind: input, shape index: {}]
  %s2 = inlined_call_operand.hbm [shape: f32[2,128,512], index: 2, kind: input, shape index: {}]
  %s3 = inlined_call_operand.vmem [shape: f32[2,1,512], index: 3, kind: input, shape index: {}]
  %s4 = inlined_call_operand.vmem [shape: f32[128,128], index: 4, kind: input, shape index: {}]
  %s5 = inlined_call_operand.vmem [shape: f32[1,128], index: 5, kind: input, shape index: {}]
  %s6 = inlined_call_operand.vmem [shape: f32[8,128], index: 6, kind: output, shape index: {}]
  %s7 = sld [smem:[#allocation0]]
  $region77: #{lstm_model_forward.1} parent=0
    _
  %s9 = ssub.s32 1, %s7
  %s10 = scalar_select 0, %s9, %s7
  $region1: #{lstm_model_forward.1} parent=0
    #allocation5 [shape = 'u8[524288]{0}', space=vmem, size = 0x80000, scoped, tag = 'input window, operand 1']
    #allocation6 [shape = 's32[2]{0}', space=sflag, size = 0x8, scoped, tag = 'scoped memory for lstm_model_forward.1']
    #allocation7 [shape = 'u8[524288]{0}', space=vmem, size = 0x80000, scoped, tag = 'input window, operand 2']
    #allocation8 [shape = 's32[2]{0}', space=sflag, size = 0x8, scoped, tag = 'scoped memory for lstm_model_forward.1']
    %11 = vsyncpa [#allocation6], 0
    %s12 = scalar_lea.sflag [#allocation6], 1
    %13 = vsyncpa %s12, 0
    %14 = vsyncpa [#allocation8], 0
    %s15 = scalar_lea.sflag [#allocation8], 1
    %16 = vsyncpa %s15, 0
    loop: start=0, step=1, limit=6
    $region2: #{lstm_model_forward.1} parent=1 // loop_pre_header
      _
    $region3: #{lstm_model_forward.1} parent=1 // loop_header
      %s18 = sphi 0, %s22
      %p19 = scmp.ge.s32.totalorder %s18, 6
      %s25 = sphi 0, %s37
      %s26 = sphi 0, %s33
      %s27 = sphi 0, %s25
      %s28 = sphi 0, %s26
      %s29 = sphi 0, %s27
      %s30 = sphi 0, %s28
      %s44 = sphi 0, %s46
      %s47 = sphi 0, %s44
      %s48 = sphi 0, %s47
      %s64 = sphi 0, %s48
      %s70 = sphi 0, %s72
      %s73 = sphi 0, %s70
      %s74 = sphi 0, %s73
      %s90 = sphi 0, %s74
      %s96 = sphi 0, %s98
      %s99 = sphi 0, %s96
      %s100 = sphi 0, %s99
      %s116 = sphi 0, %s100
      %s122 = sphi 0, %s124
      %s125 = sphi 0, %s122
      %s126 = sphi 0, %s125
      %s142 = sphi 0, %s126
      %s146 = sphi 0, %s146
      %s148 = sphi 0, %s146
      %s149 = sphi 0, %s148
      %s163 = sphi 0, %s149
      %s167 = sphi 0, %s167
      %s169 = sphi 0, %s167
      %s170 = sphi 0, %s169
      %s184 = sphi 0, %s170
      %s188 = sphi 0, %s188
      %s190 = sphi 0, %s188
      %s191 = sphi 0, %s190
      %s205 = sphi 0, %s191
    $region4: #{lstm_model_forward.1} parent=1 // loop_header_branch
      %21 = sbr.rel (%p19) target = $region8
    $region5: #{lstm_model_forward.1} parent=1 // loop_body
      %s23 = ssub.s32 %s18, 1
      %s24 = ssub.s32 %s18, 2
      %s31 = sadd.s32 1, %s26
      %p32 = scmp.ge.s32.totalorder %s31, 2
      %s33 = scalar_select %p32, 0, %s31
      %s34 = sadd.s32 1, %s25
      %s35 = scalar_select %p32, %s34, %s25
      %p36 = scmp.ge.s32.totalorder %s35, 2
      %s37 = scalar_select %p36, 0, %s35
      %p38 = scmp.eq.s32.totalorder %s25, 0
      %s39 = scalar_select %p38, %s26, 0
      %p40 = scmp.eq.s32.totalorder %s37, 0
      %s41 = scalar_select %p40, %s33, 0
      %s42 = ssub.s32 %s39, %s41
      %p43 = scmp.eq.s32.totalorder %s42, 0
      %s45 = sadd.s32 %s44, 1
      %s46 = scalar_select %p43, %s44, %s45
      %p49 = pneg %p43
      %p50 = scmp.eq.s32.totalorder %s18, 3
      %p51 = por %p49, %p50
      %p52 = scmp.ne.s32.totalorder %s44, %s47
      %p53 = scmp.eq.s32.totalorder %s18, 0
      %p54 = por %p52, %p53
      %p55 = scmp.ne.s32.totalorder %s44, %s47
      %p56 = scmp.eq.s32.totalorder %s23, 3
      %p57 = por %p55, %p56
      %p58 = scmp.ne.s32.totalorder %s47, %s48
      %p59 = scmp.eq.s32.totalorder %s23, 0
      %p60 = por %p58, %p59
      %p61 = scmp.ne.s32.totalorder %s47, %s48
      %p62 = scmp.eq.s32.totalorder %s24, 3
      %p63 = por %p61, %p62
      %p65 = scmp.ne.s32.totalorder %s48, %s64
      %p66 = scmp.eq.s32.totalorder %s24, 0
      %p67 = por %p65, %p66
      %s68 = ssub.s32 %s25, %s37
      %p69 = scmp.eq.s32.totalorder %s68, 0
      %s71 = sadd.s32 %s70, 1
      %s72 = scalar_select %p69, %s70, %s71
      %p75 = pneg %p69
      %p76 = scmp.eq.s32.totalorder %s18, 3
      %p77 = por %p75, %p76
      %p78 = scmp.ne.s32.totalorder %s70, %s73
      %p79 = scmp.eq.s32.totalorder %s18, 0
      %p80 = por %p78, %p79
      %p81 = scmp.ne.s32.totalorder %s70, %s73
      %p82 = scmp.eq.s32.totalorder %s23, 3
      %p83 = por %p81, %p82
      %p84 = scmp.ne.s32.totalorder %s73, %s74
      %p85 = scmp.eq.s32.totalorder %s23, 0
      %p86 = por %p84, %p85
      %p87 = scmp.ne.s32.totalorder %s73, %s74
      %p88 = scmp.eq.s32.totalorder %s24, 3
      %p89 = por %p87, %p88
      %p91 = scmp.ne.s32.totalorder %s74, %s90
      %p92 = scmp.eq.s32.totalorder %s24, 0
      %p93 = por %p91, %p92
      %s94 = ssub.s32 %s25, %s37
      %p95 = scmp.eq.s32.totalorder %s94, 0
      %s97 = sadd.s32 %s96, 1
      %s98 = scalar_select %p95, %s96, %s97
      %p101 = pneg %p95
      %p102 = scmp.eq.s32.totalorder %s18, 3
      %p103 = por %p101, %p102
      %p104 = scmp.ne.s32.totalorder %s96, %s99
      %p105 = scmp.eq.s32.totalorder %s18, 0
      %p106 = por %p104, %p105
      %p107 = scmp.ne.s32.totalorder %s96, %s99
      %p108 = scmp.eq.s32.totalorder %s23, 3
      %p109 = por %p107, %p108
      %p110 = scmp.ne.s32.totalorder %s99, %s100
      %p111 = scmp.eq.s32.totalorder %s23, 0
      %p112 = por %p110, %p111
      %p113 = scmp.ne.s32.totalorder %s99, %s100
      %p114 = scmp.eq.s32.totalorder %s24, 3
      %p115 = por %p113, %p114
      %p117 = scmp.ne.s32.totalorder %s100, %s116
      %p118 = scmp.eq.s32.totalorder %s24, 0
      %p119 = por %p117, %p118
      %s120 = ssub.s32 %s25, %s37
      %p121 = scmp.eq.s32.totalorder %s120, 0
      %s123 = sadd.s32 %s122, 1
      %s124 = scalar_select %p121, %s122, %s123
      %p127 = pneg %p121
      %p128 = scmp.eq.s32.totalorder %s18, 3
      %p129 = por %p127, %p128
      %p130 = scmp.ne.s32.totalorder %s122, %s125
      %p131 = scmp.eq.s32.totalorder %s18, 0
      %p132 = por %p130, %p131
      %p133 = scmp.ne.s32.totalorder %s122, %s125
      %p134 = scmp.eq.s32.totalorder %s23, 3
      %p135 = por %p133, %p134
      %p136 = scmp.ne.s32.totalorder %s125, %s126
      %p137 = scmp.eq.s32.totalorder %s23, 0
      %p138 = por %p136, %p137
      %p139 = scmp.ne.s32.totalorder %s125, %s126
      %p140 = scmp.eq.s32.totalorder %s24, 3
      %p141 = por %p139, %p140
      %p143 = scmp.ne.s32.totalorder %s126, %s142
      %p144 = scmp.eq.s32.totalorder %s24, 0
      %p145 = por %p143, %p144
      %s147 = sadd.s32 %s146, 1
      %p150 = scmp.eq.s32.totalorder %s18, 3
      %p151 = scmp.ne.s32.totalorder %s146, %s148
      %p152 = scmp.eq.s32.totalorder %s18, 0
      %p153 = por %p151, %p152
      %p154 = scmp.ne.s32.totalorder %s146, %s148
      %p155 = scmp.eq.s32.totalorder %s23, 3
      %p156 = por %p154, %p155
      %p157 = scmp.ne.s32.totalorder %s148, %s149
      %p158 = scmp.eq.s32.totalorder %s23, 0
      %p159 = por %p157, %p158
      %p160 = scmp.ne.s32.totalorder %s148, %s149
      %p161 = scmp.eq.s32.totalorder %s24, 3
      %p162 = por %p160, %p161
      %p164 = scmp.ne.s32.totalorder %s149, %s163
      %p165 = scmp.eq.s32.totalorder %s24, 0
      %p166 = por %p164, %p165
      %s168 = sadd.s32 %s167, 1
      %p171 = scmp.eq.s32.totalorder %s18, 3
      %p172 = scmp.ne.s32.totalorder %s167, %s169
      %p173 = scmp.eq.s32.totalorder %s18, 0
      %p174 = por %p172, %p173
      %p175 = scmp.ne.s32.totalorder %s167, %s169
      %p176 = scmp.eq.s32.totalorder %s23, 3
      %p177 = por %p175, %p176
      %p178 = scmp.ne.s32.totalorder %s169, %s170
      %p179 = scmp.eq.s32.totalorder %s23, 0
      %p180 = por %p178, %p179
      %p181 = scmp.ne.s32.totalorder %s169, %s170
      %p182 = scmp.eq.s32.totalorder %s24, 3
      %p183 = por %p181, %p182
      %p185 = scmp.ne.s32.totalorder %s170, %s184
      %p186 = scmp.eq.s32.totalorder %s24, 0
      %p187 = por %p185, %p186
      %s189 = sadd.s32 %s188, 1
      %p192 = scmp.eq.s32.totalorder %s18, 3
      %p193 = scmp.ne.s32.totalorder %s188, %s190
      %p194 = scmp.eq.s32.totalorder %s18, 0
      %p195 = por %p193, %p194
      %p196 = scmp.ne.s32.totalorder %s188, %s190
      %p197 = scmp.eq.s32.totalorder %s23, 3
      %p198 = por %p196, %p197
      %p199 = scmp.ne.s32.totalorder %s190, %s191
      %p200 = scmp.eq.s32.totalorder %s23, 0
      %p201 = por %p199, %p200
      %p202 = scmp.ne.s32.totalorder %s190, %s191
      %p203 = scmp.eq.s32.totalorder %s24, 3
      %p204 = por %p202, %p203
      %p206 = scmp.ne.s32.totalorder %s191, %s205
      %p207 = scmp.eq.s32.totalorder %s24, 0
      %p208 = por %p206, %p207
      %p209 = scmp.le.s32.totalorder 1, %s18
      %p210 = scmp.lt.s32.totalorder %s18, 5
      %p211 = pnand %p209, %p210
      %p212 = pneg %p211
      // Predicated region
      $region9: #{lstm_model_forward.1} parent=5 // pred_check
        _
      $region10: #{lstm_model_forward.1} parent=5 // pred_check_branch
        %214 = sbr.rel (%p211) target = $region12
      $region11: #{lstm_model_forward.1} parent=5 // pred_region
        %s215 = ssub.s32 %s18, 1
        // Predicated region
        $region13: #{lstm_model_forward.1} parent=11 // pred_check
          %p216 = pneg %p159
        $region14: #{lstm_model_forward.1} parent=11 // pred_check_branch
          %218 = sbr.rel (%p216) target = $region16
        $region15: #{lstm_model_forward.1} parent=11 // pred_region
          _
        $region16: #{lstm_model_forward.1} parent=11 // pred_fallthru
          _
        // Predicated region
        $region17: #{lstm_model_forward.1} parent=11 // pred_check
          %p219 = pneg %p180
        $region18: #{lstm_model_forward.1} parent=11 // pred_check_branch
          %221 = sbr.rel (%p219) target = $region20
        $region19: #{lstm_model_forward.1} parent=11 // pred_region
          _
        $region20: #{lstm_model_forward.1} parent=11 // pred_fallthru
          _
      $region12: #{lstm_model_forward.1} parent=5 // pred_fallthru
        _
      %p222 = scmp.lt.s32.totalorder %s18, 4
      // Predicated region
      $region21: #{lstm_model_forward.1} parent=5 // pred_check
        %p223 = pneg %p222
      $region22: #{lstm_model_forward.1} parent=5 // pred_check_branch
        %225 = sbr.rel (%p223) target = $region24
      $region23: #{lstm_model_forward.1} parent=5 // pred_region
        // Predicated region
        $region25: #{lstm_model_forward.1} parent=23 // pred_check
          %p226 = pneg %p54
        $region26: #{lstm_model_forward.1} parent=23 // pred_check_branch
          %228 = sbr.rel (%p226) target = $region28
        $region27: #{lstm_model_forward.1} parent=23 // pred_region
          %p229 = scmp.eq.s32.totalorder %s25, 0
          %s230 = scalar_select %p229, %s26, 0
          %s231 = smul.u32 4, %s230
          %p232 = scmp.lt.s32.totalorder %s231, 7
          %s233 = scalar_select %p232, %s231, 7
          %s234 = smul.addr %s233, 8
          %s235 = scalar_lea.vmem %s0, %s234
          %p236 = scmp.eq.s32.totalorder %s25, 0
          %s237 = scalar_select %p236, %s26, 0
          %s238 = smul.u32 4, %s237
        $region28: #{lstm_model_forward.1} parent=23 // pred_fallthru
          _
        // Predicated region
        $region29: #{lstm_model_forward.1} parent=23 // pred_check
          %p239 = pneg %p80
        $region30: #{lstm_model_forward.1} parent=23 // pred_check_branch
          %241 = sbr.rel (%p239) target = $region32
        $region31: #{lstm_model_forward.1} parent=23 // pred_region
          %s242 = sand.u32 %s70, 1
          %s243 = scalar_lea.sflag [#allocation6], %s242
          %s244 = sand.u32 %s70, 1
          %s245 = smul.addr %s244, 512
          %s246 = scalar_lea.vmem [#allocation5], %s245
          %s248 = ssub.s32 8192, 8192
          %249 = vsyncadd %s243, %s248
          %s250 = smul.addr %s25, 64
          %s251 = smul.addr %s250, 128
          %s252 = scalar_lea.hbm %s1, %s251
          %s253 = sshll.u32 %s246, 4
          %s254 = int_to_ptr.vmem [resolvable:$true] %s253
          %259 = dma.hbm_to_vmem [thread:$0]  %s252, 8192, %s254, %s243, 512, 512, 32
        $region32: #{lstm_model_forward.1} parent=23 // pred_fallthru
          _
        // Predicated region
        $region33: #{lstm_model_forward.1} parent=23 // pred_check
          %p260 = pneg %p106
        $region34: #{lstm_model_forward.1} parent=23 // pred_check_branch
          %262 = sbr.rel (%p260) target = $region36
        $region35: #{lstm_model_forward.1} parent=23 // pred_region
          %s263 = sand.u32 %s96, 1
          %s264 = scalar_lea.sflag [#allocation8], %s263
          %s265 = sand.u32 %s96, 1
          %s266 = smul.addr %s265, 512
          %s267 = scalar_lea.vmem [#allocation7], %s266
          %s269 = ssub.s32 8192, 8192
          %270 = vsyncadd %s264, %s269
          %s271 = smul.addr %s25, 64
          %s272 = smul.addr %s271, 128
          %s273 = scalar_lea.hbm %s2, %s272
          %s274 = sshll.u32 %s267, 4
          %s275 = int_to_ptr.vmem [resolvable:$true] %s274
          %280 = dma.hbm_to_vmem [thread:$0]  %s273, 8192, %s275, %s264, 512, 512, 32
        $region36: #{lstm_model_forward.1} parent=23 // pred_fallthru
          _
        // Predicated region
        $region37: #{lstm_model_forward.1} parent=23 // pred_check
          %p281 = pneg %p132
        $region38: #{lstm_model_forward.1} parent=23 // pred_check_branch
          %283 = sbr.rel (%p281) target = $region40
        $region39: #{lstm_model_forward.1} parent=23 // pred_region
          %p284 = scmp.lt.s32.totalorder %s25, 1
          %s285 = scalar_select %p284, %s25, 1
          %s286 = smul.addr %s285, 4
          %s287 = scalar_lea.vmem %s3, %s286
        $region40: #{lstm_model_forward.1} parent=23 // pred_fallthru
          _
      $region24: #{lstm_model_forward.1} parent=5 // pred_fallthru
        _
      %p288 = scmp.le.s32.totalorder 1, %s18
      %p289 = scmp.lt.s32.totalorder %s18, 5
      %p290 = pnand %p288, %p289
      %p291 = pneg %p290
      // Predicated region
      $region41: #{lstm_model_forward.1} parent=5 // pred_check
        _
      $region42: #{lstm_model_forward.1} parent=5 // pred_check_branch
        %293 = sbr.rel (%p290) target = $region44
      $region43: #{lstm_model_forward.1} parent=5 // pred_region
        %s294 = ssub.s32 %s18, 1
        %s295 = sand.u32 %s73, 1
        %s296 = scalar_lea.sflag [#allocation6], %s295
        %s297 = sand.u32 %s73, 1
        %s298 = smul.addr %s297, 512
        %s299 = scalar_lea.vmem [#allocation5], %s298
        // Predicated region
        $region45: #{lstm_model_forward.1} parent=43 // pred_check
          %p300 = pneg %p86
        $region46: #{lstm_model_forward.1} parent=43 // pred_check_branch
          %302 = sbr.rel (%p300) target = $region48
        $region47: #{lstm_model_forward.1} parent=43 // pred_region
          %303 = dma.done %s296, 8192
        $region48: #{lstm_model_forward.1} parent=43 // pred_fallthru
          _
        %s304 = sand.u32 %s99, 1
        %s305 = scalar_lea.sflag [#allocation8], %s304
        %s306 = sand.u32 %s99, 1
        %s307 = smul.addr %s306, 512
        %s308 = scalar_lea.vmem [#allocation7], %s307
        // Predicated region
        $region49: #{lstm_model_forward.1} parent=43 // pred_check
          %p309 = pneg %p112
        $region50: #{lstm_model_forward.1} parent=43 // pred_check_branch
          %311 = sbr.rel (%p309) target = $region52
        $region51: #{lstm_model_forward.1} parent=43 // pred_region
          %312 = dma.done %s305, 8192
        $region52: #{lstm_model_forward.1} parent=43 // pred_fallthru
          _
        %p313 = scmp.eq.s32.totalorder %s27, 0
        %s314 = scalar_select %p313, %s28, 0
        %s315 = smul.u32 4, %s314
        %p316 = scmp.lt.s32.totalorder %s315, 7
        %s317 = scalar_select %p316, %s315, 7
        %s318 = smul.addr %s317, 8
        %s319 = scalar_lea.vmem %s0, %s318
        %p320 = pneg %p60
        %p321 = pneg %p57
        %s322 = sand.u32 %s73, 1
        %s323 = scalar_lea.sflag [#allocation6], %s322
        %s324 = sand.u32 %s73, 1
        %s325 = smul.addr %s324, 512
        %s326 = scalar_lea.vmem [#allocation5], %s325
        %p327 = pneg %p86
        %p328 = pneg %p83
        %s329 = sand.u32 %s99, 1
        %s330 = scalar_lea.sflag [#allocation8], %s329
        %s331 = sand.u32 %s99, 1
        %s332 = smul.addr %s331, 512
        %s333 = scalar_lea.vmem [#allocation7], %s332
        %p334 = pneg %p112
        %p335 = pneg %p109
        %p336 = scmp.lt.s32.totalorder %s27, 1
        %s337 = scalar_select %p336, %s27, 1
        %s338 = smul.addr %s337, 4
        %s339 = scalar_lea.vmem %s3, %s338
        %p340 = pneg %p138
        %p341 = pneg %p135
        %p342 = pneg %p159
        %p343 = pneg %p156
        %p344 = pneg %p180
        %p345 = pneg %p177
        %p346 = pneg %p201
        %p347 = pneg %p198
        %p348 = scmp.eq.s32.totalorder %s27, 0
        %s349 = scalar_select %p348, %s28, 0
        %s350 = smul.u32 4, %s349
        %p351 = scmp.lt.s32.totalorder %s350, 7
        %s352 = scalar_select %p351, %s350, 7
        %s353 = smul.addr %s352, 8
        %s354 = scalar_lea.vmem %s0, %s353
        %p355 = scmp.eq.s32.totalorder %s27, 0
        %s356 = scalar_select %p355, %s28, 0
        %s357 = smul.u32 4, %s356
        %p358 = scmp.lt.s32.totalorder %s27, 1
        %s359 = scalar_select %p358, %s27, 1
        %s360 = smul.addr %s359, 4
        %s361 = scalar_lea.vmem %s3, %s360
        %p362 = scmp.eq.s32.totalorder %s27, 1
        %p363 = scmp.eq.s32.totalorder %s28, 1
        %p364 = pnand %p362, %p363
        %p365 = pneg %p364
        %p366 = scmp.eq.s32.totalorder %s28, 0
        // Predicated region
        $region53: #{lstm_model_forward.1} parent=43 // pred_check
          %p367 = pneg %p366
        $region54: #{lstm_model_forward.1} parent=43 // pred_check_branch
          %369 = sbr.rel (%p367) target = $region56
        $region55: #{lstm_model_forward.1} parent=43 // pred_region
          %370 = vst [vmem:[#allocation3] sm:$0xff] 0.0
          %371 = vst [vmem:[#allocation4] sm:$0xff] 0.0
        $region56: #{lstm_model_forward.1} parent=43 // pred_fallthru
          _
        %s372 = smul.u32 %s28, 4
        %p373 = scmp.eq.s32.totalorder %s27, 0
        // Predicated region
        $region57: #{lstm_model_forward.1} parent=43 // pred_check
          %p374 = pneg %p373
        $region58: #{lstm_model_forward.1} parent=43 // pred_check_branch
          %376 = sbr.rel (%p374) target = $region60
        $region59: #{lstm_model_forward.1} parent=43 // pred_region
          %v377 = vld [vmem:[%s354] sm:$0xff]
          %v378 = vld [vmem:[%s354 + $0x8] sm:$0xff]
          %v379 = vld [vmem:[%s354 + $0x10] sm:$0xff]
          %v380 = vld [vmem:[%s354 + $0x18] sm:$0xff]
          %s381 = smul.u32 %s372, 8
          %s382 = scalar_lea.vmem [#allocation2], %s381
          %383 = vst [vmem:[%s382] sm:$0xff] %v377
          %384 = vst [vmem:[%s382 + $0x8] sm:$0xff] %v378
          %385 = vst [vmem:[%s382 + $0x10] sm:$0xff] %v379
          %386 = vst [vmem:[%s382 + $0x18] sm:$0xff] %v380
        $region60: #{lstm_model_forward.1} parent=43 // pred_fallthru
          _
        %s387 = smul.u32 %s372, 8
        %s388 = scalar_lea.vmem [#allocation2], %s387
        %v389 = vld [vmem:[%s388] sm:$0xff]
        %v390 = vld [vmem:[%s388 + $0x8] sm:$0xff]
        %v391 = vld [vmem:[%s388 + $0x10] sm:$0xff]
        %v392 = vld [vmem:[%s388 + $0x18] sm:$0xff]
        %v393 = vld [vmem:[%s299] sm:$0xff]
        %v394 = vld [vmem:[%s299 + $0x8] sm:$0xff]
        %v395 = vld [vmem:[%s299 + $0x10] sm:$0xff]
        %v396 = vld [vmem:[%s299 + $0x18] sm:$0xff]
        %v397 = vld [vmem:[%s299 + $0x20] sm:$0xff]
        %v398 = vld [vmem:[%s299 + $0x28] sm:$0xff]
        %v399 = vld [vmem:[%s299 + $0x30] sm:$0xff]
        %v400 = vld [vmem:[%s299 + $0x38] sm:$0xff]
        %v401 = vld [vmem:[%s299 + $0x40] sm:$0xff]
        %v402 = vld [vmem:[%s299 + $0x48] sm:$0xff]
        %v403 = vld [vmem:[%s299 + $0x50] sm:$0xff]
        %v404 = vld [vmem:[%s299 + $0x58] sm:$0xff]
        %v405 = vld [vmem:[%s299 + $0x60] sm:$0xff]
        %v406 = vld [vmem:[%s299 + $0x68] sm:$0xff]
        %v407 = vld [vmem:[%s299 + $0x70] sm:$0xff]
        %v408 = vld [vmem:[%s299 + $0x78] sm:$0xff]
        %v409 = vld [vmem:[%s299 + $0x80] sm:$0xff]
        %v410 = vld [vmem:[%s299 + $0x88] sm:$0xff]
        %v411 = vld [vmem:[%s299 + $0x90] sm:$0xff]
        %v412 = vld [vmem:[%s299 + $0x98] sm:$0xff]
        %v413 = vld [vmem:[%s299 + $0xa0] sm:$0xff]
        %v414 = vld [vmem:[%s299 + $0xa8] sm:$0xff]
        %v415 = vld [vmem:[%s299 + $0xb0] sm:$0xff]
        %v416 = vld [vmem:[%s299 + $0xb8] sm:$0xff]
        %v417 = vld [vmem:[%s299 + $0xc0] sm:$0xff]
        %v418 = vld [vmem:[%s299 + $0xc8] sm:$0xff]
        %v419 = vld [vmem:[%s299 + $0xd0] sm:$0xff]
        %v420 = vld [vmem:[%s299 + $0xd8] sm:$0xff]
        %v421 = vld [vmem:[%s299 + $0xe0] sm:$0xff]
        %v422 = vld [vmem:[%s299 + $0xe8] sm:$0xff]
        %v423 = vld [vmem:[%s299 + $0xf0] sm:$0xff]
        %v424 = vld [vmem:[%s299 + $0xf8] sm:$0xff]
        %v425 = vld [vmem:[%s299 + $0x100] sm:$0xff]
        %v426 = vld [vmem:[%s299 + $0x108] sm:$0xff]
        %v427 = vld [vmem:[%s299 + $0x110] sm:$0xff]
        %v428 = vld [vmem:[%s299 + $0x118] sm:$0xff]
        %v429 = vld [vmem:[%s299 + $0x120] sm:$0xff]
        %v430 = vld [vmem:[%s299 + $0x128] sm:$0xff]
        %v431 = vld [vmem:[%s299 + $0x130] sm:$0xff]
        %v432 = vld [vmem:[%s299 + $0x138] sm:$0xff]
        %v433 = vld [vmem:[%s299 + $0x140] sm:$0xff]
        %v434 = vld [vmem:[%s299 + $0x148] sm:$0xff]
        %v435 = vld [vmem:[%s299 + $0x150] sm:$0xff]
        %v436 = vld [vmem:[%s299 + $0x158] sm:$0xff]
        %v437 = vld [vmem:[%s299 + $0x160] sm:$0xff]
        %v438 = vld [vmem:[%s299 + $0x168] sm:$0xff]
        %v439 = vld [vmem:[%s299 + $0x170] sm:$0xff]
        %v440 = vld [vmem:[%s299 + $0x178] sm:$0xff]
        %v441 = vld [vmem:[%s299 + $0x180] sm:$0xff]
        %v442 = vld [vmem:[%s299 + $0x188] sm:$0xff]
        %v443 = vld [vmem:[%s299 + $0x190] sm:$0xff]
        %v444 = vld [vmem:[%s299 + $0x198] sm:$0xff]
        %v445 = vld [vmem:[%s299 + $0x1a0] sm:$0xff]
        %v446 = vld [vmem:[%s299 + $0x1a8] sm:$0xff]
        %v447 = vld [vmem:[%s299 + $0x1b0] sm:$0xff]
        %v448 = vld [vmem:[%s299 + $0x1b8] sm:$0xff]
        %v449 = vld [vmem:[%s299 + $0x1c0] sm:$0xff]
        %v450 = vld [vmem:[%s299 + $0x1c8] sm:$0xff]
        %v451 = vld [vmem:[%s299 + $0x1d0] sm:$0xff]
        %v452 = vld [vmem:[%s299 + $0x1d8] sm:$0xff]
        %v453 = vld [vmem:[%s299 + $0x1e0] sm:$0xff]
        %v454 = vld [vmem:[%s299 + $0x1e8] sm:$0xff]
        %v455 = vld [vmem:[%s299 + $0x1f0] sm:$0xff]
        %v456 = vld [vmem:[%s299 + $0x1f8] sm:$0xff]
        %v457 = vld [vmem:[%s308] sm:$0xff]
        %v458 = vld [vmem:[%s308 + $0x8] sm:$0xff]
        %v459 = vld [vmem:[%s308 + $0x10] sm:$0xff]
        %v460 = vld [vmem:[%s308 + $0x18] sm:$0xff]
        %v461 = vld [vmem:[%s308 + $0x20] sm:$0xff]
        %v462 = vld [vmem:[%s308 + $0x28] sm:$0xff]
        %v463 = vld [vmem:[%s308 + $0x30] sm:$0xff]
        %v464 = vld [vmem:[%s308 + $0x38] sm:$0xff]
        %v465 = vld [vmem:[%s308 + $0x40] sm:$0xff]
        %v466 = vld [vmem:[%s308 + $0x48] sm:$0xff]
        %v467 = vld [vmem:[%s308 + $0x50] sm:$0xff]
        %v468 = vld [vmem:[%s308 + $0x58] sm:$0xff]
        %v469 = vld [vmem:[%s308 + $0x60] sm:$0xff]
        %v470 = vld [vmem:[%s308 + $0x68] sm:$0xff]
        %v471 = vld [vmem:[%s308 + $0x70] sm:$0xff]
        %v472 = vld [vmem:[%s308 + $0x78] sm:$0xff]
        %v473 = vld [vmem:[%s308 + $0x80] sm:$0xff]
        %v474 = vld [vmem:[%s308 + $0x88] sm:$0xff]
        %v475 = vld [vmem:[%s308 + $0x90] sm:$0xff]
        %v476 = vld [vmem:[%s308 + $0x98] sm:$0xff]
        %v477 = vld [vmem:[%s308 + $0xa0] sm:$0xff]
        %v478 = vld [vmem:[%s308 + $0xa8] sm:$0xff]
        %v479 = vld [vmem:[%s308 + $0xb0] sm:$0xff]
        %v480 = vld [vmem:[%s308 + $0xb8] sm:$0xff]
        %v481 = vld [vmem:[%s308 + $0xc0] sm:$0xff]
        %v482 = vld [vmem:[%s308 + $0xc8] sm:$0xff]
        %v483 = vld [vmem:[%s308 + $0xd0] sm:$0xff]
        %v484 = vld [vmem:[%s308 + $0xd8] sm:$0xff]
        %v485 = vld [vmem:[%s308 + $0xe0] sm:$0xff]
        %v486 = vld [vmem:[%s308 + $0xe8] sm:$0xff]
        %v487 = vld [vmem:[%s308 + $0xf0] sm:$0xff]
        %v488 = vld [vmem:[%s308 + $0xf8] sm:$0xff]
        %v489 = vld [vmem:[%s308 + $0x100] sm:$0xff]
        %v490 = vld [vmem:[%s308 + $0x108] sm:$0xff]
        %v491 = vld [vmem:[%s308 + $0x110] sm:$0xff]
        %v492 = vld [vmem:[%s308 + $0x118] sm:$0xff]
        %v493 = vld [vmem:[%s308 + $0x120] sm:$0xff]
        %v494 = vld [vmem:[%s308 + $0x128] sm:$0xff]
        %v495 = vld [vmem:[%s308 + $0x130] sm:$0xff]
        %v496 = vld [vmem:[%s308 + $0x138] sm:$0xff]
        %v497 = vld [vmem:[%s308 + $0x140] sm:$0xff]
        %v498 = vld [vmem:[%s308 + $0x148] sm:$0xff]
        %v499 = vld [vmem:[%s308 + $0x150] sm:$0xff]
        %v500 = vld [vmem:[%s308 + $0x158] sm:$0xff]
        %v501 = vld [vmem:[%s308 + $0x160] sm:$0xff]
        %v502 = vld [vmem:[%s308 + $0x168] sm:$0xff]
        %v503 = vld [vmem:[%s308 + $0x170] sm:$0xff]
        %v504 = vld [vmem:[%s308 + $0x178] sm:$0xff]
        %v505 = vld [vmem:[%s308 + $0x180] sm:$0xff]
        %v506 = vld [vmem:[%s308 + $0x188] sm:$0xff]
        %v507 = vld [vmem:[%s308 + $0x190] sm:$0xff]
        %v508 = vld [vmem:[%s308 + $0x198] sm:$0xff]
        %v509 = vld [vmem:[%s308 + $0x1a0] sm:$0xff]
        %v510 = vld [vmem:[%s308 + $0x1a8] sm:$0xff]
        %v511 = vld [vmem:[%s308 + $0x1b0] sm:$0xff]
        %v512 = vld [vmem:[%s308 + $0x1b8] sm:$0xff]
        %v513 = vld [vmem:[%s308 + $0x1c0] sm:$0xff]
        %v514 = vld [vmem:[%s308 + $0x1c8] sm:$0xff]
        %v515 = vld [vmem:[%s308 + $0x1d0] sm:$0xff]
        %v516 = vld [vmem:[%s308 + $0x1d8] sm:$0xff]
        %v517 = vld [vmem:[%s308 + $0x1e0] sm:$0xff]
        %v518 = vld [vmem:[%s308 + $0x1e8] sm:$0xff]
        %v519 = vld [vmem:[%s308 + $0x1f0] sm:$0xff]
        %v520 = vld [vmem:[%s308 + $0x1f8] sm:$0xff]
        %v521 = vld [vmem:[%s361] sm:$0xf]
        %v523 = vlaneseq
        %v524 = vshrl.u32 %v523, 7
        %v525 = vsub.s32 0, %v524
        %v526 = vrot.slane %v521, %v525
        %v527 = vlaneseq
        %v528 = vshrl.u32 %v527, 7
        %v529 = vsub.s32 1, %v528
        %v530 = vrot.slane %v521, %v529
        %v531 = vlaneseq
        %v532 = vshrl.u32 %v531, 7
        %v533 = vsub.s32 2, %v532
        %v534 = vrot.slane %v521, %v533
        %v535 = vlaneseq
        %v536 = vshrl.u32 %v535, 7
        %v537 = vsub.s32 3, %v536
        %v538 = vrot.slane %v521, %v537
        %543 = vmatprep.subr.mxu0 %v394
        %544 = vmatpush1.msra.mxu0 %v393
        %545 = vmatprep.subr.mxu0 %v398
        %546 = vmatpush1.msra.mxu0 %v397
        %547 = vmatprep.subr.mxu0 %v402
        %548 = vmatpush1.msra.mxu0 %v401
        %549 = vmatprep.subr.mxu0 %v406
        %550 = vmatpush1.msra.mxu0 %v405
        %551 = vmatprep.subr.mxu0 %v410
        %552 = vmatpush1.msra.mxu0 %v409
        %553 = vmatprep.subr.mxu0 %v414
        %554 = vmatpush1.msra.mxu0 %v413
        %555 = vmatprep.subr.mxu0 %v418
        %556 = vmatpush1.msra.mxu0 %v417
        %557 = vmatprep.subr.mxu0 %v422
        %558 = vmatpush1.msra.mxu0 %v421
        %559 = vmatprep.subr.mxu0 %v426
        %560 = vmatpush1.msra.mxu0 %v425
        %561 = vmatprep.subr.mxu0 %v430
        %562 = vmatpush1.msra.mxu0 %v429
        %563 = vmatprep.subr.mxu0 %v434
        %564 = vmatpush1.msra.mxu0 %v433
        %565 = vmatprep.subr.mxu0 %v438
        %566 = vmatpush1.msra.mxu0 %v437
        %567 = vmatprep.subr.mxu0 %v442
        %568 = vmatpush1.msra.mxu0 %v441
        %569 = vmatprep.subr.mxu0 %v446
        %570 = vmatpush1.msra.mxu0 %v445
        %571 = vmatprep.subr.mxu0 %v450
        %572 = vmatpush1.msra.mxu0 %v449
        %573 = vmatprep.subr.mxu0 %v454
        %574 = vmatpush1.msra.mxu0 %v453
        %575 = vmatprep.subr.mxu0 0.0
        %576 = vmatpush1.msra.mxu0 0.0
        %577 = vmatprep.subr.mxu0 0.0
        %578 = vmatpush1.msra.mxu0 0.0
        %579 = vmatprep.subr.mxu0 0.0
        %580 = vmatpush1.msra.mxu0 0.0
        %581 = vmatprep.subr.mxu0 0.0
        %582 = vmatpush1.msra.mxu0 0.0
        %583 = vmatprep.subr.mxu0 0.0
        %584 = vmatpush1.msra.mxu0 0.0
        %585 = vmatprep.subr.mxu0 0.0
        %586 = vmatpush1.msra.mxu0 0.0
        %587 = vmatprep.subr.mxu0 0.0
        %588 = vmatpush1.msra.mxu0 0.0
        %589 = vmatprep.subr.mxu0 0.0
        %590 = vmatpush1.msra.mxu0 0.0
        %591 = vmatprep.subr.mxu0 0.0
        %592 = vmatpush1.msra.mxu0 0.0
        %593 = vmatprep.subr.mxu0 0.0
        %594 = vmatpush1.msra.mxu0 0.0
        %595 = vmatprep.subr.mxu0 0.0
        %596 = vmatpush1.msra.mxu0 0.0
        %597 = vmatprep.subr.mxu0 0.0
        %598 = vmatpush1.msra.mxu0 0.0
        %599 = vmatprep.subr.mxu0 0.0
        %600 = vmatpush1.msra.mxu0 0.0
        %601 = vmatprep.subr.mxu0 0.0
        %602 = vmatpush1.msra.mxu0 0.0
        %603 = vmatprep.subr.mxu0 0.0
        %604 = vmatpush1.msra.mxu0 0.0
        %605 = vmatprep.subr.mxu0 0.0
        %606 = vmatpush1.msra.mxu0 0.0
        %607 = vmatprep.mubr.f32.mxu0 0.0
        %608 = vmatmul.mubr.f32.gmra.mrb[0].mxu0 %v389
        %v609 = vpop.f32.mrb[0].mxu0
        %v610 = vadd.f32 %v526, %v609
        %v611 = vpop.f32.mrb[0].mxu0
        %v612 = vadd.f32 %v530, %v611
        %613 = vmatprep.mubr.f32.mxu0 0.0
        %614 = vmatmul.mubr.f32.gmra.mrb[0].mxu0 %v390
        %v615 = vpop.f32.mrb[0].mxu0
        %v616 = vadd.f32 %v526, %v615
        %v617 = vpop.f32.mrb[0].mxu0
        %v618 = vadd.f32 %v530, %v617
        %619 = vmatprep.mubr.f32.mxu0 0.0
        %620 = vmatmul.mubr.f32.gmra.mrb[0].mxu0 %v391
        %v621 = vpop.f32.mrb[0].mxu0
        %v622 = vadd.f32 %v526, %v621
        %v623 = vpop.f32.mrb[0].mxu0
        %v624 = vadd.f32 %v530, %v623
        %625 = vmatprep.mubr.f32.mxu0 0.0
        %626 = vmatmul.mubr.f32.gmra.mrb[0].mxu0 %v392
        %v627 = vpop.f32.mrb[0].mxu0
        %v628 = vadd.f32 %v526, %v627
        %v629 = vpop.f32.mrb[0].mxu0
        %v630 = vadd.f32 %v530, %v629
        %631 = vdwg.mxu0
        %632 = vmatprep.subr.mxu0 %v396
        %633 = vmatpush1.msra.mxu0 %v395
        %634 = vmatprep.subr.mxu0 %v400
        %635 = vmatpush1.msra.mxu0 %v399
        %636 = vmatprep.subr.mxu0 %v404
        %637 = vmatpush1.msra.mxu0 %v403
        %638 = vmatprep.subr.mxu0 %v408
        %639 = vmatpush1.msra.mxu0 %v407
        %640 = vmatprep.subr.mxu0 %v412
        %641 = vmatpush1.msra.mxu0 %v411
        %642 = vmatprep.subr.mxu0 %v416
        %643 = vmatpush1.msra.mxu0 %v415
        %644 = vmatprep.subr.mxu0 %v420
        %645 = vmatpush1.msra.mxu0 %v419
        %646 = vmatprep.subr.mxu0 %v424
        %647 = vmatpush1.msra.mxu0 %v423
        %648 = vmatprep.subr.mxu0 %v428
        %649 = vmatpush1.msra.mxu0 %v427
        %650 = vmatprep.subr.mxu0 %v432
        %651 = vmatpush1.msra.mxu0 %v431
        %652 = vmatprep.subr.mxu0 %v436
        %653 = vmatpush1.msra.mxu0 %v435
        %654 = vmatprep.subr.mxu0 %v440
        %655 = vmatpush1.msra.mxu0 %v439
        %656 = vmatprep.subr.mxu0 %v444
        %657 = vmatpush1.msra.mxu0 %v443
        %658 = vmatprep.subr.mxu0 %v448
        %659 = vmatpush1.msra.mxu0 %v447
        %660 = vmatprep.subr.mxu0 %v452
        %661 = vmatpush1.msra.mxu0 %v451
        %662 = vmatprep.subr.mxu0 %v456
        %663 = vmatpush1.msra.mxu0 %v455
        %664 = vmatprep.subr.mxu0 0.0
        %665 = vmatpush1.msra.mxu0 0.0
        %666 = vmatprep.subr.mxu0 0.0
        %667 = vmatpush1.msra.mxu0 0.0
        %668 = vmatprep.subr.mxu0 0.0
        %669 = vmatpush1.msra.mxu0 0.0
        %670 = vmatprep.subr.mxu0 0.0
        %671 = vmatpush1.msra.mxu0 0.0
        %672 = vmatprep.subr.mxu0 0.0
        %673 = vmatpush1.msra.mxu0 0.0
        %674 = vmatprep.subr.mxu0 0.0
        %675 = vmatpush1.msra.mxu0 0.0
        %676 = vmatprep.subr.mxu0 0.0
        %677 = vmatpush1.msra.mxu0 0.0
        %678 = vmatprep.subr.mxu0 0.0
        %679 = vmatpush1.msra.mxu0 0.0
        %680 = vmatprep.subr.mxu0 0.0
        %681 = vmatpush1.msra.mxu0 0.0
        %682 = vmatprep.subr.mxu0 0.0
        %683 = vmatpush1.msra.mxu0 0.0
        %684 = vmatprep.subr.mxu0 0.0
        %685 = vmatpush1.msra.mxu0 0.0
        %686 = vmatprep.subr.mxu0 0.0
        %687 = vmatpush1.msra.mxu0 0.0
        %688 = vmatprep.subr.mxu0 0.0
        %689 = vmatpush1.msra.mxu0 0.0
        %690 = vmatprep.subr.mxu0 0.0
        %691 = vmatpush1.msra.mxu0 0.0
        %692 = vmatprep.subr.mxu0 0.0
        %693 = vmatpush1.msra.mxu0 0.0
        %694 = vmatprep.subr.mxu0 0.0
        %695 = vmatpush1.msra.mxu0 0.0
        %696 = vmatprep.mubr.f32.mxu0 0.0
        %697 = vmatmul.mubr.f32.gmra.mrb[0].mxu0 %v389
        %v698 = vpop.f32.mrb[0].mxu0
        %v699 = vadd.f32 %v534, %v698
        %v700 = vpop.f32.mrb[0].mxu0
        %v701 = vadd.f32 %v538, %v700
        %702 = vmatprep.mubr.f32.mxu0 0.0
        %703 = vmatmul.mubr.f32.gmra.mrb[0].mxu0 %v390
        %v704 = vpop.f32.mrb[0].mxu0
        %v705 = vadd.f32 %v534, %v704
        %v706 = vpop.f32.mrb[0].mxu0
        %v707 = vadd.f32 %v538, %v706
        %708 = vmatprep.mubr.f32.mxu0 0.0
        %709 = vmatmul.mubr.f32.gmra.mrb[0].mxu0 %v391
        %v710 = vpop.f32.mrb[0].mxu0
        %v711 = vadd.f32 %v534, %v710
        %v712 = vpop.f32.mrb[0].mxu0
        %v713 = vadd.f32 %v538, %v712
        %714 = vmatprep.mubr.f32.mxu0 0.0
        %715 = vmatmul.mubr.f32.gmra.mrb[0].mxu0 %v392
        %v716 = vpop.f32.mrb[0].mxu0
        %v717 = vadd.f32 %v534, %v716
        %v718 = vpop.f32.mrb[0].mxu0
        %v719 = vadd.f32 %v538, %v718
        %720 = vdwg.mxu0
        %v721 = vld [vmem:[#allocation3] sm:$0xff]
        %v722 = vld [vmem:[#allocation4] sm:$0xff]
        %723 = vmatprep.subr.mxu0 %v458
        %724 = vmatpush1.msra.mxu0 %v457
        %725 = vmatprep.subr.mxu0 %v462
        %726 = vmatpush1.msra.mxu0 %v461
        %727 = vmatprep.subr.mxu0 %v466
        %728 = vmatpush1.msra.mxu0 %v465
        %729 = vmatprep.subr.mxu0 %v470
        %730 = vmatpush1.msra.mxu0 %v469
        %731 = vmatprep.subr.mxu0 %v474
        %732 = vmatpush1.msra.mxu0 %v473
        %733 = vmatprep.subr.mxu0 %v478
        %734 = vmatpush1.msra.mxu0 %v477
        %735 = vmatprep.subr.mxu0 %v482
        %736 = vmatpush1.msra.mxu0 %v481
        %737 = vmatprep.subr.mxu0 %v486
        %738 = vmatpush1.msra.mxu0 %v485
        %739 = vmatprep.subr.mxu0 %v490
        %740 = vmatpush1.msra.mxu0 %v489
        %741 = vmatprep.subr.mxu0 %v494
        %742 = vmatpush1.msra.mxu0 %v493
        %743 = vmatprep.subr.mxu0 %v498
        %744 = vmatpush1.msra.mxu0 %v497
        %745 = vmatprep.subr.mxu0 %v502
        %746 = vmatpush1.msra.mxu0 %v501
        %747 = vmatprep.subr.mxu0 %v506
        %748 = vmatpush1.msra.mxu0 %v505
        %749 = vmatprep.subr.mxu0 %v510
        %750 = vmatpush1.msra.mxu0 %v509
        %751 = vmatprep.subr.mxu0 %v514
        %752 = vmatpush1.msra.mxu0 %v513
        %753 = vmatprep.subr.mxu0 %v518
        %754 = vmatpush1.msra.mxu0 %v517
        %755 = vmatprep.subr.mxu0 0.0
        %756 = vmatpush1.msra.mxu0 0.0
        %757 = vmatprep.subr.mxu0 0.0
        %758 = vmatpush1.msra.mxu0 0.0
        %759 = vmatprep.subr.mxu0 0.0
        %760 = vmatpush1.msra.mxu0 0.0
        %761 = vmatprep.subr.mxu0 0.0
        %762 = vmatpush1.msra.mxu0 0.0
        %763 = vmatprep.subr.mxu0 0.0
        %764 = vmatpush1.msra.mxu0 0.0
        %765 = vmatprep.subr.mxu0 0.0
        %766 = vmatpush1.msra.mxu0 0.0
        %767 = vmatprep.subr.mxu0 0.0
        %768 = vmatpush1.msra.mxu0 0.0
        %769 = vmatprep.subr.mxu0 0.0
        %770 = vmatpush1.msra.mxu0 0.0
        %771 = vmatprep.subr.mxu0 0.0
        %772 = vmatpush1.msra.mxu0 0.0
        %773 = vmatprep.subr.mxu0 0.0
        %774 = vmatpush1.msra.mxu0 0.0
        %775 = vmatprep.subr.mxu0 0.0
        %776 = vmatpush1.msra.mxu0 0.0
        %777 = vmatprep.subr.mxu0 0.0
        %778 = vmatpush1.msra.mxu0 0.0
        %779 = vmatprep.subr.mxu0 0.0
        %780 = vmatpush1.msra.mxu0 0.0
        %781 = vmatprep.subr.mxu0 0.0
        %782 = vmatpush1.msra.mxu0 0.0
        %783 = vmatprep.subr.mxu0 0.0
        %784 = vmatpush1.msra.mxu0 0.0
        %785 = vmatprep.subr.mxu0 0.0
        %786 = vmatpush1.msra.mxu0 0.0
        %787 = vmatprep.mubr.f32.mxu0 0.0
        %788 = vmatmul.mubr.f32.gmra.mrb[0].mxu0 %v721
        %v789 = vpop.f32.mrb[0].mxu0
        %v790 = vadd.f32 0.0, %v789
        %v791 = vpop.f32.mrb[0].mxu0
        %v792 = vadd.f32 0.0, %v791
        %793 = vdwg.mxu0
        %794 = vmatprep.subr.mxu0 %v460
        %795 = vmatpush1.msra.mxu0 %v459
        %796 = vmatprep.subr.mxu0 %v464
        %797 = vmatpush1.msra.mxu0 %v463
        %798 = vmatprep.subr.mxu0 %v468
        %799 = vmatpush1.msra.mxu0 %v467
        %800 = vmatprep.subr.mxu0 %v472
        %801 = vmatpush1.msra.mxu0 %v471
        %802 = vmatprep.subr.mxu0 %v476
        %803 = vmatpush1.msra.mxu0 %v475
        %804 = vmatprep.subr.mxu0 %v480
        %805 = vmatpush1.msra.mxu0 %v479
        %806 = vmatprep.subr.mxu0 %v484
        %807 = vmatpush1.msra.mxu0 %v483
        %808 = vmatprep.subr.mxu0 %v488
        %809 = vmatpush1.msra.mxu0 %v487
        %810 = vmatprep.subr.mxu0 %v492
        %811 = vmatpush1.msra.mxu0 %v491
        %812 = vmatprep.subr.mxu0 %v496
        %813 = vmatpush1.msra.mxu0 %v495
        %814 = vmatprep.subr.mxu0 %v500
        %815 = vmatpush1.msra.mxu0 %v499
        %816 = vmatprep.subr.mxu0 %v504
        %817 = vmatpush1.msra.mxu0 %v503
        %818 = vmatprep.subr.mxu0 %v508
        %819 = vmatpush1.msra.mxu0 %v507
        %820 = vmatprep.subr.mxu0 %v512
        %821 = vmatpush1.msra.mxu0 %v511
        %822 = vmatprep.subr.mxu0 %v516
        %823 = vmatpush1.msra.mxu0 %v515
        %824 = vmatprep.subr.mxu0 %v520
        %825 = vmatpush1.msra.mxu0 %v519
        %826 = vmatprep.subr.mxu0 0.0
        %827 = vmatpush1.msra.mxu0 0.0
        %828 = vmatprep.subr.mxu0 0.0
        %829 = vmatpush1.msra.mxu0 0.0
        %830 = vmatprep.subr.mxu0 0.0
        %831 = vmatpush1.msra.mxu0 0.0
        %832 = vmatprep.subr.mxu0 0.0
        %833 = vmatpush1.msra.mxu0 0.0
        %834 = vmatprep.subr.mxu0 0.0
        %835 = vmatpush1.msra.mxu0 0.0
        %836 = vmatprep.subr.mxu0 0.0
        %837 = vmatpush1.msra.mxu0 0.0
        %838 = vmatprep.subr.mxu0 0.0
        %839 = vmatpush1.msra.mxu0 0.0
        %840 = vmatprep.subr.mxu0 0.0
        %841 = vmatpush1.msra.mxu0 0.0
        %842 = vmatprep.subr.mxu0 0.0
        %843 = vmatpush1.msra.mxu0 0.0
        %844 = vmatprep.subr.mxu0 0.0
        %845 = vmatpush1.msra.mxu0 0.0
        %846 = vmatprep.subr.mxu0 0.0
        %847 = vmatpush1.msra.mxu0 0.0
        %848 = vmatprep.subr.mxu0 0.0
        %849 = vmatpush1.msra.mxu0 0.0
        %850 = vmatprep.subr.mxu0 0.0
        %851 = vmatpush1.msra.mxu0 0.0
        %852 = vmatprep.subr.mxu0 0.0
        %853 = vmatpush1.msra.mxu0 0.0
        %854 = vmatprep.subr.mxu0 0.0
        %855 = vmatpush1.msra.mxu0 0.0
        %856 = vmatprep.subr.mxu0 0.0
        %857 = vmatpush1.msra.mxu0 0.0
        %858 = vmatprep.mubr.f32.mxu0 0.0
        %859 = vmatmul.mubr.f32.gmra.mrb[0].mxu0 %v721
        %v860 = vpop.f32.mrb[0].mxu0
        %v861 = vadd.f32 0.0, %v860
        %v862 = vpop.f32.mrb[0].mxu0
        %v863 = vadd.f32 0.0, %v862
        %864 = vdwg.mxu0
        %v865 = vadd.f32 %v610, %v790
        %v866 = vadd.f32 %v612, %v792
        %v867 = vadd.f32 %v699, %v861
        %v868 = vadd.f32 %v701, %v863
        %v869 = vmul.f32 %v865, 0.5
        %v870 = vmul.f32 %v866, 0.5
        %v871 = vmul.f32 %v867, 0.5
        %v872 = vtanh.pop %v869
        %v873 = vtanh.pop %v870
        %v874 = vtanh.pop %v871
        %v875 = vmul.f32 %v872, 0.5
        %v876 = vmul.f32 %v873, 0.5
        %v877 = vmul.f32 %v874, 0.5
        %v878 = vadd.f32 %v875, 0.5
        %v879 = vadd.f32 %v876, 0.5
        %v880 = vadd.f32 %v877, 0.5
        %v881 = vtanh.pop %v868
        %v882 = vmul.f32 %v879, %v722
        %v883 = vmul.f32 %v878, %v881
        %v884 = vadd.f32 %v882, %v883
        %v885 = vtanh.pop %v884
        %v886 = vmul.f32 %v880, %v885
        %887 = vst [vmem:[%s388] sm:$0xff] %v886
        %888 = vmatprep.subr.mxu0 %v458
        %889 = vmatpush1.msra.mxu0 %v457
        %890 = vmatprep.subr.mxu0 %v462
        %891 = vmatpush1.msra.mxu0 %v461
        %892 = vmatprep.subr.mxu0 %v466
        %893 = vmatpush1.msra.mxu0 %v465
        %894 = vmatprep.subr.mxu0 %v470
        %895 = vmatpush1.msra.mxu0 %v469
        %896 = vmatprep.subr.mxu0 %v474
        %897 = vmatpush1.msra.mxu0 %v473
        %898 = vmatprep.subr.mxu0 %v478
        %899 = vmatpush1.msra.mxu0 %v477
        %900 = vmatprep.subr.mxu0 %v482
        %901 = vmatpush1.msra.mxu0 %v481
        %902 = vmatprep.subr.mxu0 %v486
        %903 = vmatpush1.msra.mxu0 %v485
        %904 = vmatprep.subr.mxu0 %v490
        %905 = vmatpush1.msra.mxu0 %v489
        %906 = vmatprep.subr.mxu0 %v494
        %907 = vmatpush1.msra.mxu0 %v493
        %908 = vmatprep.subr.mxu0 %v498
        %909 = vmatpush1.msra.mxu0 %v497
        %910 = vmatprep.subr.mxu0 %v502
        %911 = vmatpush1.msra.mxu0 %v501
        %912 = vmatprep.subr.mxu0 %v506
        %913 = vmatpush1.msra.mxu0 %v505
        %914 = vmatprep.subr.mxu0 %v510
        %915 = vmatpush1.msra.mxu0 %v509
        %916 = vmatprep.subr.mxu0 %v514
        %917 = vmatpush1.msra.mxu0 %v513
        %918 = vmatprep.subr.mxu0 %v518
        %919 = vmatpush1.msra.mxu0 %v517
        %920 = vmatprep.subr.mxu0 0.0
        %921 = vmatpush1.msra.mxu0 0.0
        %922 = vmatprep.subr.mxu0 0.0
        %923 = vmatpush1.msra.mxu0 0.0
        %924 = vmatprep.subr.mxu0 0.0
        %925 = vmatpush1.msra.mxu0 0.0
        %926 = vmatprep.subr.mxu0 0.0
        %927 = vmatpush1.msra.mxu0 0.0
        %928 = vmatprep.subr.mxu0 0.0
        %929 = vmatpush1.msra.mxu0 0.0
        %930 = vmatprep.subr.mxu0 0.0
        %931 = vmatpush1.msra.mxu0 0.0
        %932 = vmatprep.subr.mxu0 0.0
        %933 = vmatpush1.msra.mxu0 0.0
        %934 = vmatprep.subr.mxu0 0.0
        %935 = vmatpush1.msra.mxu0 0.0
        %936 = vmatprep.subr.mxu0 0.0
        %937 = vmatpush1.msra.mxu0 0.0
        %938 = vmatprep.subr.mxu0 0.0
        %939 = vmatpush1.msra.mxu0 0.0
        %940 = vmatprep.subr.mxu0 0.0
        %941 = vmatpush1.msra.mxu0 0.0
        %942 = vmatprep.subr.mxu0 0.0
        %943 = vmatpush1.msra.mxu0 0.0
        %944 = vmatprep.subr.mxu0 0.0
        %945 = vmatpush1.msra.mxu0 0.0
        %946 = vmatprep.subr.mxu0 0.0
        %947 = vmatpush1.msra.mxu0 0.0
        %948 = vmatprep.subr.mxu0 0.0
        %949 = vmatpush1.msra.mxu0 0.0
        %950 = vmatprep.subr.mxu0 0.0
        %951 = vmatpush1.msra.mxu0 0.0
        %952 = vmatprep.mubr.f32.mxu0 0.0
        %953 = vmatmul.mubr.f32.gmra.mrb[0].mxu0 %v886
        %v954 = vpop.f32.mrb[0].mxu0
        %v955 = vadd.f32 0.0, %v954
        %v956 = vpop.f32.mrb[0].mxu0
        %v957 = vadd.f32 0.0, %v956
        %958 = vdwg.mxu0
        %959 = vmatprep.subr.mxu0 %v460
        %960 = vmatpush1.msra.mxu0 %v459
        %961 = vmatprep.subr.mxu0 %v464
        %962 = vmatpush1.msra.mxu0 %v463
        %963 = vmatprep.subr.mxu0 %v468
        %964 = vmatpush1.msra.mxu0 %v467
        %965 = vmatprep.subr.mxu0 %v472
        %966 = vmatpush1.msra.mxu0 %v471
        %967 = vmatprep.subr.mxu0 %v476
        %968 = vmatpush1.msra.mxu0 %v475
        %969 = vmatprep.subr.mxu0 %v480
        %970 = vmatpush1.msra.mxu0 %v479
        %971 = vmatprep.subr.mxu0 %v484
        %972 = vmatpush1.msra.mxu0 %v483
        %973 = vmatprep.subr.mxu0 %v488
        %974 = vmatpush1.msra.mxu0 %v487
        %975 = vmatprep.subr.mxu0 %v492
        %976 = vmatpush1.msra.mxu0 %v491
        %977 = vmatprep.subr.mxu0 %v496
        %978 = vmatpush1.msra.mxu0 %v495
        %979 = vmatprep.subr.mxu0 %v500
        %980 = vmatpush1.msra.mxu0 %v499
        %981 = vmatprep.subr.mxu0 %v504
        %982 = vmatpush1.msra.mxu0 %v503
        %983 = vmatprep.subr.mxu0 %v508
        %984 = vmatpush1.msra.mxu0 %v507
        %985 = vmatprep.subr.mxu0 %v512
        %986 = vmatpush1.msra.mxu0 %v511
        %987 = vmatprep.subr.mxu0 %v516
        %988 = vmatpush1.msra.mxu0 %v515
        %989 = vmatprep.subr.mxu0 %v520
        %990 = vmatpush1.msra.mxu0 %v519
        %991 = vmatprep.subr.mxu0 0.0
        %992 = vmatpush1.msra.mxu0 0.0
        %993 = vmatprep.subr.mxu0 0.0
        %994 = vmatpush1.msra.mxu0 0.0
        %995 = vmatprep.subr.mxu0 0.0
        %996 = vmatpush1.msra.mxu0 0.0
        %997 = vmatprep.subr.mxu0 0.0
        %998 = vmatpush1.msra.mxu0 0.0
        %999 = vmatprep.subr.mxu0 0.0
        %1000 = vmatpush1.msra.mxu0 0.0
        %1001 = vmatprep.subr.mxu0 0.0
        %1002 = vmatpush1.msra.mxu0 0.0
        %1003 = vmatprep.subr.mxu0 0.0
        %1004 = vmatpush1.msra.mxu0 0.0
        %1005 = vmatprep.subr.mxu0 0.0
        %1006 = vmatpush1.msra.mxu0 0.0
        %1007 = vmatprep.subr.mxu0 0.0
        %1008 = vmatpush1.msra.mxu0 0.0
        %1009 = vmatprep.subr.mxu0 0.0
        %1010 = vmatpush1.msra.mxu0 0.0
        %1011 = vmatprep.subr.mxu0 0.0
        %1012 = vmatpush1.msra.mxu0 0.0
        %1013 = vmatprep.subr.mxu0 0.0
        %1014 = vmatpush1.msra.mxu0 0.0
        %1015 = vmatprep.subr.mxu0 0.0
        %1016 = vmatpush1.msra.mxu0 0.0
        %1017 = vmatprep.subr.mxu0 0.0
        %1018 = vmatpush1.msra.mxu0 0.0
        %1019 = vmatprep.subr.mxu0 0.0
        %1020 = vmatpush1.msra.mxu0 0.0
        %1021 = vmatprep.subr.mxu0 0.0
        %1022 = vmatpush1.msra.mxu0 0.0
        %1023 = vmatprep.mubr.f32.mxu0 0.0
        %1024 = vmatmul.mubr.f32.gmra.mrb[0].mxu0 %v886
        %v1025 = vpop.f32.mrb[0].mxu0
        %v1026 = vadd.f32 0.0, %v1025
        %v1027 = vpop.f32.mrb[0].mxu0
        %v1028 = vadd.f32 0.0, %v1027
        %1029 = vdwg.mxu0
        %v1030 = vadd.f32 %v616, %v955
        %v1031 = vadd.f32 %v618, %v957
        %v1032 = vadd.f32 %v705, %v1026
        %v1033 = vadd.f32 %v707, %v1028
        %v1034 = vmul.f32 %v1030, 0.5
        %v1035 = vmul.f32 %v1031, 0.5
        %v1036 = vmul.f32 %v1032, 0.5
        %v1037 = vtanh.pop %v1034
        %v1038 = vtanh.pop %v1035
        %v1039 = vtanh.pop %v1036
        %v1040 = vmul.f32 %v1037, 0.5
        %v1041 = vmul.f32 %v1038, 0.5
        %v1042 = vmul.f32 %v1039, 0.5
        %v1043 = vadd.f32 %v1040, 0.5
        %v1044 = vadd.f32 %v1041, 0.5
        %v1045 = vadd.f32 %v1042, 0.5
        %v1046 = vtanh.pop %v1033
        %v1047 = vmul.f32 %v1044, %v884
        %v1048 = vmul.f32 %v1043, %v1046
        %v1049 = vadd.f32 %v1047, %v1048
        %v1050 = vtanh.pop %v1049
        %v1051 = vmul.f32 %v1045, %v1050
        %s1052 = sadd.s32 %s372, 1
        %s1053 = smul.u32 %s1052, 8
        %s1054 = scalar_lea.vmem [#allocation2], %s1053
        %1055 = vst [vmem:[%s1054] sm:$0xff] %v1051
        %1056 = vmatprep.subr.mxu0 %v458
        %1057 = vmatpush1.msra.mxu0 %v457
        %1058 = vmatprep.subr.mxu0 %v462
        %1059 = vmatpush1.msra.mxu0 %v461
        %1060 = vmatprep.subr.mxu0 %v466
        %1061 = vmatpush1.msra.mxu0 %v465
        %1062 = vmatprep.subr.mxu0 %v470
        %1063 = vmatpush1.msra.mxu0 %v469
        %1064 = vmatprep.subr.mxu0 %v474
        %1065 = vmatpush1.msra.mxu0 %v473
        %1066 = vmatprep.subr.mxu0 %v478
        %1067 = vmatpush1.msra.mxu0 %v477
        %1068 = vmatprep.subr.mxu0 %v482
        %1069 = vmatpush1.msra.mxu0 %v481
        %1070 = vmatprep.subr.mxu0 %v486
        %1071 = vmatpush1.msra.mxu0 %v485
        %1072 = vmatprep.subr.mxu0 %v490
        %1073 = vmatpush1.msra.mxu0 %v489
        %1074 = vmatprep.subr.mxu0 %v494
        %1075 = vmatpush1.msra.mxu0 %v493
        %1076 = vmatprep.subr.mxu0 %v498
        %1077 = vmatpush1.msra.mxu0 %v497
        %1078 = vmatprep.subr.mxu0 %v502
        %1079 = vmatpush1.msra.mxu0 %v501
        %1080 = vmatprep.subr.mxu0 %v506
        %1081 = vmatpush1.msra.mxu0 %v505
        %1082 = vmatprep.subr.mxu0 %v510
        %1083 = vmatpush1.msra.mxu0 %v509
        %1084 = vmatprep.subr.mxu0 %v514
        %1085 = vmatpush1.msra.mxu0 %v513
        %1086 = vmatprep.subr.mxu0 %v518
        %1087 = vmatpush1.msra.mxu0 %v517
        %1088 = vmatprep.subr.mxu0 0.0
        %1089 = vmatpush1.msra.mxu0 0.0
        %1090 = vmatprep.subr.mxu0 0.0
        %1091 = vmatpush1.msra.mxu0 0.0
        %1092 = vmatprep.subr.mxu0 0.0
        %1093 = vmatpush1.msra.mxu0 0.0
        %1094 = vmatprep.subr.mxu0 0.0
        %1095 = vmatpush1.msra.mxu0 0.0
        %1096 = vmatprep.subr.mxu0 0.0
        %1097 = vmatpush1.msra.mxu0 0.0
        %1098 = vmatprep.subr.mxu0 0.0
        %1099 = vmatpush1.msra.mxu0 0.0
        %1100 = vmatprep.subr.mxu0 0.0
        %1101 = vmatpush1.msra.mxu0 0.0
        %1102 = vmatprep.subr.mxu0 0.0
        %1103 = vmatpush1.msra.mxu0 0.0
        %1104 = vmatprep.subr.mxu0 0.0
        %1105 = vmatpush1.msra.mxu0 0.0
        %1106 = vmatprep.subr.mxu0 0.0
        %1107 = vmatpush1.msra.mxu0 0.0
        %1108 = vmatprep.subr.mxu0 0.0
        %1109 = vmatpush1.msra.mxu0 0.0
        %1110 = vmatprep.subr.mxu0 0.0
        %1111 = vmatpush1.msra.mxu0 0.0
        %1112 = vmatprep.subr.mxu0 0.0
        %1113 = vmatpush1.msra.mxu0 0.0
        %1114 = vmatprep.subr.mxu0 0.0
        %1115 = vmatpush1.msra.mxu0 0.0
        %1116 = vmatprep.subr.mxu0 0.0
        %1117 = vmatpush1.msra.mxu0 0.0
        %1118 = vmatprep.subr.mxu0 0.0
        %1119 = vmatpush1.msra.mxu0 0.0
        %1120 = vmatprep.mubr.f32.mxu0 0.0
        %1121 = vmatmul.mubr.f32.gmra.mrb[0].mxu0 %v1051
        %v1122 = vpop.f32.mrb[0].mxu0
        %v1123 = vadd.f32 0.0, %v1122
        %v1124 = vpop.f32.mrb[0].mxu0
        %v1125 = vadd.f32 0.0, %v1124
        %1126 = vdwg.mxu0
        %1127 = vmatprep.subr.mxu0 %v460
        %1128 = vmatpush1.msra.mxu0 %v459
        %1129 = vmatprep.subr.mxu0 %v464
        %1130 = vmatpush1.msra.mxu0 %v463
        %1131 = vmatprep.subr.mxu0 %v468
        %1132 = vmatpush1.msra.mxu0 %v467
        %1133 = vmatprep.subr.mxu0 %v472
        %1134 = vmatpush1.msra.mxu0 %v471
        %1135 = vmatprep.subr.mxu0 %v476
        %1136 = vmatpush1.msra.mxu0 %v475
        %1137 = vmatprep.subr.mxu0 %v480
        %1138 = vmatpush1.msra.mxu0 %v479
        %1139 = vmatprep.subr.mxu0 %v484
        %1140 = vmatpush1.msra.mxu0 %v483
        %1141 = vmatprep.subr.mxu0 %v488
        %1142 = vmatpush1.msra.mxu0 %v487
        %1143 = vmatprep.subr.mxu0 %v492
        %1144 = vmatpush1.msra.mxu0 %v491
        %1145 = vmatprep.subr.mxu0 %v496
        %1146 = vmatpush1.msra.mxu0 %v495
        %1147 = vmatprep.subr.mxu0 %v500
        %1148 = vmatpush1.msra.mxu0 %v499
        %1149 = vmatprep.subr.mxu0 %v504
        %1150 = vmatpush1.msra.mxu0 %v503
        %1151 = vmatprep.subr.mxu0 %v508
        %1152 = vmatpush1.msra.mxu0 %v507
        %1153 = vmatprep.subr.mxu0 %v512
        %1154 = vmatpush1.msra.mxu0 %v511
        %1155 = vmatprep.subr.mxu0 %v516
        %1156 = vmatpush1.msra.mxu0 %v515
        %1157 = vmatprep.subr.mxu0 %v520
        %1158 = vmatpush1.msra.mxu0 %v519
        %1159 = vmatprep.subr.mxu0 0.0
        %1160 = vmatpush1.msra.mxu0 0.0
        %1161 = vmatprep.subr.mxu0 0.0
        %1162 = vmatpush1.msra.mxu0 0.0
        %1163 = vmatprep.subr.mxu0 0.0
        %1164 = vmatpush1.msra.mxu0 0.0
        %1165 = vmatprep.subr.mxu0 0.0
        %1166 = vmatpush1.msra.mxu0 0.0
        %1167 = vmatprep.subr.mxu0 0.0
        %1168 = vmatpush1.msra.mxu0 0.0
        %1169 = vmatprep.subr.mxu0 0.0
        %1170 = vmatpush1.msra.mxu0 0.0
        %1171 = vmatprep.subr.mxu0 0.0
        %1172 = vmatpush1.msra.mxu0 0.0
        %1173 = vmatprep.subr.mxu0 0.0
        %1174 = vmatpush1.msra.mxu0 0.0
        %1175 = vmatprep.subr.mxu0 0.0
        %1176 = vmatpush1.msra.mxu0 0.0
        %1177 = vmatprep.subr.mxu0 0.0
        %1178 = vmatpush1.msra.mxu0 0.0
        %1179 = vmatprep.subr.mxu0 0.0
        %1180 = vmatpush1.msra.mxu0 0.0
        %1181 = vmatprep.subr.mxu0 0.0
        %1182 = vmatpush1.msra.mxu0 0.0
        %1183 = vmatprep.subr.mxu0 0.0
        %1184 = vmatpush1.msra.mxu0 0.0
        %1185 = vmatprep.subr.mxu0 0.0
        %1186 = vmatpush1.msra.mxu0 0.0
        %1187 = vmatprep.subr.mxu0 0.0
        %1188 = vmatpush1.msra.mxu0 0.0
        %1189 = vmatprep.subr.mxu0 0.0
        %1190 = vmatpush1.msra.mxu0 0.0
        %1191 = vmatprep.mubr.f32.mxu0 0.0
        %1192 = vmatmul.mubr.f32.gmra.mrb[0].mxu0 %v1051
        %v1193 = vpop.f32.mrb[0].mxu0
        %v1194 = vadd.f32 0.0, %v1193
        %v1195 = vpop.f32.mrb[0].mxu0
        %v1196 = vadd.f32 0.0, %v1195
        %1197 = vdwg.mxu0
        %v1198 = vadd.f32 %v622, %v1123
        %v1199 = vadd.f32 %v624, %v1125
        %v1200 = vadd.f32 %v711, %v1194
        %v1201 = vadd.f32 %v713, %v1196
        %v1202 = vmul.f32 %v1198, 0.5
        %v1203 = vmul.f32 %v1199, 0.5
        %v1204 = vmul.f32 %v1200, 0.5
        %v1205 = vtanh.pop %v1202
        %v1206 = vtanh.pop %v1203
        %v1207 = vtanh.pop %v1204
        %v1208 = vmul.f32 %v1205, 0.5
        %v1209 = vmul.f32 %v1206, 0.5
        %v1210 = vmul.f32 %v1207, 0.5
        %v1211 = vadd.f32 %v1208, 0.5
        %v1212 = vadd.f32 %v1209, 0.5
        %v1213 = vadd.f32 %v1210, 0.5
        %v1214 = vtanh.pop %v1201
        %v1215 = vmul.f32 %v1212, %v1049
        %v1216 = vmul.f32 %v1211, %v1214
        %v1217 = vadd.f32 %v1215, %v1216
        %v1218 = vtanh.pop %v1217
        %v1219 = vmul.f32 %v1213, %v1218
        %s1220 = sadd.s32 %s372, 2
        %s1221 = smul.u32 %s1220, 8
        %s1222 = scalar_lea.vmem [#allocation2], %s1221
        %1223 = vst [vmem:[%s1222] sm:$0xff] %v1219
        %1224 = vmatprep.subr.mxu0 %v458
        %1225 = vmatpush1.msra.mxu0 %v457
        %1226 = vmatprep.subr.mxu0 %v462
        %1227 = vmatpush1.msra.mxu0 %v461
        %1228 = vmatprep.subr.mxu0 %v466
        %1229 = vmatpush1.msra.mxu0 %v465
        %1230 = vmatprep.subr.mxu0 %v470
        %1231 = vmatpush1.msra.mxu0 %v469
        %1232 = vmatprep.subr.mxu0 %v474
        %1233 = vmatpush1.msra.mxu0 %v473
        %1234 = vmatprep.subr.mxu0 %v478
        %1235 = vmatpush1.msra.mxu0 %v477
        %1236 = vmatprep.subr.mxu0 %v482
        %1237 = vmatpush1.msra.mxu0 %v481
        %1238 = vmatprep.subr.mxu0 %v486
        %1239 = vmatpush1.msra.mxu0 %v485
        %1240 = vmatprep.subr.mxu0 %v490
        %1241 = vmatpush1.msra.mxu0 %v489
        %1242 = vmatprep.subr.mxu0 %v494
        %1243 = vmatpush1.msra.mxu0 %v493
        %1244 = vmatprep.subr.mxu0 %v498
        %1245 = vmatpush1.msra.mxu0 %v497
        %1246 = vmatprep.subr.mxu0 %v502
        %1247 = vmatpush1.msra.mxu0 %v501
        %1248 = vmatprep.subr.mxu0 %v506
        %1249 = vmatpush1.msra.mxu0 %v505
        %1250 = vmatprep.subr.mxu0 %v510
        %1251 = vmatpush1.msra.mxu0 %v509
        %1252 = vmatprep.subr.mxu0 %v514
        %1253 = vmatpush1.msra.mxu0 %v513
        %1254 = vmatprep.subr.mxu0 %v518
        %1255 = vmatpush1.msra.mxu0 %v517
        %1256 = vmatprep.subr.mxu0 0.0
        %1257 = vmatpush1.msra.mxu0 0.0
        %1258 = vmatprep.subr.mxu0 0.0
        %1259 = vmatpush1.msra.mxu0 0.0
        %1260 = vmatprep.subr.mxu0 0.0
        %1261 = vmatpush1.msra.mxu0 0.0
        %1262 = vmatprep.subr.mxu0 0.0
        %1263 = vmatpush1.msra.mxu0 0.0
        %1264 = vmatprep.subr.mxu0 0.0
        %1265 = vmatpush1.msra.mxu0 0.0
        %1266 = vmatprep.subr.mxu0 0.0
        %1267 = vmatpush1.msra.mxu0 0.0
        %1268 = vmatprep.subr.mxu0 0.0
        %1269 = vmatpush1.msra.mxu0 0.0
        %1270 = vmatprep.subr.mxu0 0.0
        %1271 = vmatpush1.msra.mxu0 0.0
        %1272 = vmatprep.subr.mxu0 0.0
        %1273 = vmatpush1.msra.mxu0 0.0
        %1274 = vmatprep.subr.mxu0 0.0
        %1275 = vmatpush1.msra.mxu0 0.0
        %1276 = vmatprep.subr.mxu0 0.0
        %1277 = vmatpush1.msra.mxu0 0.0
        %1278 = vmatprep.subr.mxu0 0.0
        %1279 = vmatpush1.msra.mxu0 0.0
        %1280 = vmatprep.subr.mxu0 0.0
        %1281 = vmatpush1.msra.mxu0 0.0
        %1282 = vmatprep.subr.mxu0 0.0
        %1283 = vmatpush1.msra.mxu0 0.0
        %1284 = vmatprep.subr.mxu0 0.0
        %1285 = vmatpush1.msra.mxu0 0.0
        %1286 = vmatprep.subr.mxu0 0.0
        %1287 = vmatpush1.msra.mxu0 0.0
        %1288 = vmatprep.mubr.f32.mxu0 0.0
        %1289 = vmatmul.mubr.f32.gmra.mrb[0].mxu0 %v1219
        %v1290 = vpop.f32.mrb[0].mxu0
        %v1291 = vadd.f32 0.0, %v1290
        %v1292 = vpop.f32.mrb[0].mxu0
        %v1293 = vadd.f32 0.0, %v1292
        %1294 = vdwg.mxu0
        %1295 = vmatprep.subr.mxu0 %v460
        %1296 = vmatpush1.msra.mxu0 %v459
        %1297 = vmatprep.subr.mxu0 %v464
        %1298 = vmatpush1.msra.mxu0 %v463
        %1299 = vmatprep.subr.mxu0 %v468
        %1300 = vmatpush1.msra.mxu0 %v467
        %1301 = vmatprep.subr.mxu0 %v472
        %1302 = vmatpush1.msra.mxu0 %v471
        %1303 = vmatprep.subr.mxu0 %v476
        %1304 = vmatpush1.msra.mxu0 %v475
        %1305 = vmatprep.subr.mxu0 %v480
        %1306 = vmatpush1.msra.mxu0 %v479
        %1307 = vmatprep.subr.mxu0 %v484
        %1308 = vmatpush1.msra.mxu0 %v483
        %1309 = vmatprep.subr.mxu0 %v488
        %1310 = vmatpush1.msra.mxu0 %v487
        %1311 = vmatprep.subr.mxu0 %v492
        %1312 = vmatpush1.msra.mxu0 %v491
        %1313 = vmatprep.subr.mxu0 %v496
        %1314 = vmatpush1.msra.mxu0 %v495
        %1315 = vmatprep.subr.mxu0 %v500
        %1316 = vmatpush1.msra.mxu0 %v499
        %1317 = vmatprep.subr.mxu0 %v504
        %1318 = vmatpush1.msra.mxu0 %v503
        %1319 = vmatprep.subr.mxu0 %v508
        %1320 = vmatpush1.msra.mxu0 %v507
        %1321 = vmatprep.subr.mxu0 %v512
        %1322 = vmatpush1.msra.mxu0 %v511
        %1323 = vmatprep.subr.mxu0 %v516
        %1324 = vmatpush1.msra.mxu0 %v515
        %1325 = vmatprep.subr.mxu0 %v520
        %1326 = vmatpush1.msra.mxu0 %v519
        %1327 = vmatprep.subr.mxu0 0.0
        %1328 = vmatpush1.msra.mxu0 0.0
        %1329 = vmatprep.subr.mxu0 0.0
        %1330 = vmatpush1.msra.mxu0 0.0
        %1331 = vmatprep.subr.mxu0 0.0
        %1332 = vmatpush1.msra.mxu0 0.0
        %1333 = vmatprep.subr.mxu0 0.0
        %1334 = vmatpush1.msra.mxu0 0.0
        %1335 = vmatprep.subr.mxu0 0.0
        %1336 = vmatpush1.msra.mxu0 0.0
        %1337 = vmatprep.subr.mxu0 0.0
        %1338 = vmatpush1.msra.mxu0 0.0
        %1339 = vmatprep.subr.mxu0 0.0
        %1340 = vmatpush1.msra.mxu0 0.0
        %1341 = vmatprep.subr.mxu0 0.0
        %1342 = vmatpush1.msra.mxu0 0.0
        %1343 = vmatprep.subr.mxu0 0.0
        %1344 = vmatpush1.msra.mxu0 0.0
        %1345 = vmatprep.subr.mxu0 0.0
        %1346 = vmatpush1.msra.mxu0 0.0
        %1347 = vmatprep.subr.mxu0 0.0
        %1348 = vmatpush1.msra.mxu0 0.0
        %1349 = vmatprep.subr.mxu0 0.0
        %1350 = vmatpush1.msra.mxu0 0.0
        %1351 = vmatprep.subr.mxu0 0.0
        %1352 = vmatpush1.msra.mxu0 0.0
        %1353 = vmatprep.subr.mxu0 0.0
        %1354 = vmatpush1.msra.mxu0 0.0
        %1355 = vmatprep.subr.mxu0 0.0
        %1356 = vmatpush1.msra.mxu0 0.0
        %1357 = vmatprep.subr.mxu0 0.0
        %1358 = vmatpush1.msra.mxu0 0.0
        %1359 = vmatprep.mubr.f32.mxu0 0.0
        %1360 = vmatmul.mubr.f32.gmra.mrb[0].mxu0 %v1219
        %v1361 = vpop.f32.mrb[0].mxu0
        %v1362 = vadd.f32 0.0, %v1361
        %v1363 = vpop.f32.mrb[0].mxu0
        %v1364 = vadd.f32 0.0, %v1363
        %1365 = vdwg.mxu0
        %v1366 = vadd.f32 %v628, %v1291
        %v1367 = vadd.f32 %v630, %v1293
        %v1368 = vadd.f32 %v717, %v1362
        %v1369 = vadd.f32 %v719, %v1364
        %v1370 = vmul.f32 %v1366, 0.5
        %v1371 = vmul.f32 %v1367, 0.5
        %v1372 = vmul.f32 %v1368, 0.5
        %v1373 = vtanh.pop %v1370
        %v1374 = vtanh.pop %v1371
        %v1375 = vtanh.pop %v1372
        %v1376 = vmul.f32 %v1373, 0.5
        %v1377 = vmul.f32 %v1374, 0.5
        %v1378 = vmul.f32 %v1375, 0.5
        %v1379 = vadd.f32 %v1376, 0.5
        %v1380 = vadd.f32 %v1377, 0.5
        %v1381 = vadd.f32 %v1378, 0.5
        %v1382 = vtanh.pop %v1369
        %v1383 = vmul.f32 %v1380, %v1217
        %v1384 = vmul.f32 %v1379, %v1382
        %v1385 = vadd.f32 %v1383, %v1384
        %v1386 = vtanh.pop %v1385
        %v1387 = vmul.f32 %v1381, %v1386
        %s1388 = sadd.s32 %s372, 3
        %s1389 = smul.u32 %s1388, 8
        %s1390 = scalar_lea.vmem [#allocation2], %s1389
        %1391 = vst [vmem:[%s1390] sm:$0xff] %v1387
        %1392 = vst [vmem:[#allocation3] sm:$0xff] %v1387
        %1393 = vst [vmem:[#allocation4] sm:$0xff] %v1385
        // Predicated region
        $region61: #{lstm_model_forward.1} parent=43 // pred_check
          _
        $region62: #{lstm_model_forward.1} parent=43 // pred_check_branch
          %1395 = sbr.rel (%p364) target = $region64
        $region63: #{lstm_model_forward.1} parent=43 // pred_region
          %v1396 = vld [vmem:[%s4] sm:$0xff]
          %v1397 = vld [vmem:[%s4 + $0x8] sm:$0xff]
          %v1398 = vld [vmem:[%s4 + $0x10] sm:$0xff]
          %v1399 = vld [vmem:[%s4 + $0x18] sm:$0xff]
          %v1400 = vld [vmem:[%s4 + $0x20] sm:$0xff]
          %v1401 = vld [vmem:[%s4 + $0x28] sm:$0xff]
          %v1402 = vld [vmem:[%s4 + $0x30] sm:$0xff]
          %v1403 = vld [vmem:[%s4 + $0x38] sm:$0xff]
          %v1404 = vld [vmem:[%s4 + $0x40] sm:$0xff]
          %v1405 = vld [vmem:[%s4 + $0x48] sm:$0xff]
          %v1406 = vld [vmem:[%s4 + $0x50] sm:$0xff]
          %v1407 = vld [vmem:[%s4 + $0x58] sm:$0xff]
          %v1408 = vld [vmem:[%s4 + $0x60] sm:$0xff]
          %v1409 = vld [vmem:[%s4 + $0x68] sm:$0xff]
          %v1410 = vld [vmem:[%s4 + $0x70] sm:$0xff]
          %v1411 = vld [vmem:[%s4 + $0x78] sm:$0xff]
          %v1412 = vld [vmem:[%s5] sm:$0x1]
          %v1414 = vlaneseq
          %v1415 = vshrl.u32 %v1414, 7
          %v1416 = vsub.s32 0, %v1415
          %v1417 = vrot.slane %v1412, %v1416
          %1419 = vmatprep.subr.mxu0 0.0
          %1420 = vmatpush1.msra.mxu0 %v1396
          %1421 = vmatprep.subr.mxu0 0.0
          %1422 = vmatpush1.msra.mxu0 %v1397
          %1423 = vmatprep.subr.mxu0 0.0
          %1424 = vmatpush1.msra.mxu0 %v1398
          %1425 = vmatprep.subr.mxu0 0.0
          %1426 = vmatpush1.msra.mxu0 %v1399
          %1427 = vmatprep.subr.mxu0 0.0
          %1428 = vmatpush1.msra.mxu0 %v1400
          %1429 = vmatprep.subr.mxu0 0.0
          %1430 = vmatpush1.msra.mxu0 %v1401
          %1431 = vmatprep.subr.mxu0 0.0
          %1432 = vmatpush1.msra.mxu0 %v1402
          %1433 = vmatprep.subr.mxu0 0.0
          %1434 = vmatpush1.msra.mxu0 %v1403
          %1435 = vmatprep.subr.mxu0 0.0
          %1436 = vmatpush1.msra.mxu0 %v1404
          %1437 = vmatprep.subr.mxu0 0.0
          %1438 = vmatpush1.msra.mxu0 %v1405
          %1439 = vmatprep.subr.mxu0 0.0
          %1440 = vmatpush1.msra.mxu0 %v1406
          %1441 = vmatprep.subr.mxu0 0.0
          %1442 = vmatpush1.msra.mxu0 %v1407
          %1443 = vmatprep.subr.mxu0 0.0
          %1444 = vmatpush1.msra.mxu0 %v1408
          %1445 = vmatprep.subr.mxu0 0.0
          %1446 = vmatpush1.msra.mxu0 %v1409
          %1447 = vmatprep.subr.mxu0 0.0
          %1448 = vmatpush1.msra.mxu0 %v1410
          %1449 = vmatprep.subr.mxu0 0.0
          %1450 = vmatpush1.msra.mxu0 %v1411
          %1451 = vmatprep.subr.mxu0 0.0
          %1452 = vmatpush1.msra.mxu0 0.0
          %1453 = vmatprep.subr.mxu0 0.0
          %1454 = vmatpush1.msra.mxu0 0.0
          %1455 = vmatprep.subr.mxu0 0.0
          %1456 = vmatpush1.msra.mxu0 0.0
          %1457 = vmatprep.subr.mxu0 0.0
          %1458 = vmatpush1.msra.mxu0 0.0
          %1459 = vmatprep.subr.mxu0 0.0
          %1460 = vmatpush1.msra.mxu0 0.0
          %1461 = vmatprep.subr.mxu0 0.0
          %1462 = vmatpush1.msra.mxu0 0.0
          %1463 = vmatprep.subr.mxu0 0.0
          %1464 = vmatpush1.msra.mxu0 0.0
          %1465 = vmatprep.subr.mxu0 0.0
          %1466 = vmatpush1.msra.mxu0 0.0
          %1467 = vmatprep.subr.mxu0 0.0
          %1468 = vmatpush1.msra.mxu0 0.0
          %1469 = vmatprep.subr.mxu0 0.0
          %1470 = vmatpush1.msra.mxu0 0.0
          %1471 = vmatprep.subr.mxu0 0.0
          %1472 = vmatpush1.msra.mxu0 0.0
          %1473 = vmatprep.subr.mxu0 0.0
          %1474 = vmatpush1.msra.mxu0 0.0
          %1475 = vmatprep.subr.mxu0 0.0
          %1476 = vmatpush1.msra.mxu0 0.0
          %1477 = vmatprep.subr.mxu0 0.0
          %1478 = vmatpush1.msra.mxu0 0.0
          %1479 = vmatprep.subr.mxu0 0.0
          %1480 = vmatpush1.msra.mxu0 0.0
          %1481 = vmatprep.subr.mxu0 0.0
          %1482 = vmatpush1.msra.mxu0 0.0
          %1483 = vmatprep.mubr.f32.mxu0 0.0
          %1484 = vmatmul.mubr.f32.gmra.mrb[0].mxu0 %v1387
          %v1485 = vpop.f32.mrb[0].mxu0
          %v1486 = vadd.f32 %v1417, %v1485
          %v1487 = vpop.f32.mrb[0].mxu0
          %1488 = vdwg.mxu0
          %1489 = vst [vmem:[%s6] sm:$0xff] %v1486
        $region64: #{lstm_model_forward.1} parent=43 // pred_fallthru
          _
        // Predicated region
        $region65: #{lstm_model_forward.1} parent=43 // pred_check
          %p1490 = pneg %p198
        $region66: #{lstm_model_forward.1} parent=43 // pred_check_branch
          %1492 = sbr.rel (%p1490) target = $region68
        $region67: #{lstm_model_forward.1} parent=43 // pred_region
          _
        $region68: #{lstm_model_forward.1} parent=43 // pred_fallthru
          _
        // Predicated region
        $region69: #{lstm_model_forward.1} parent=43 // pred_check
          %p1493 = pneg %p198
        $region70: #{lstm_model_forward.1} parent=43 // pred_check_branch
          %1495 = sbr.rel (%p1493) target = $region72
        $region71: #{lstm_model_forward.1} parent=43 // pred_region
          _
        $region72: #{lstm_model_forward.1} parent=43 // pred_fallthru
          _
      $region44: #{lstm_model_forward.1} parent=5 // pred_fallthru
        _
      %p1496 = scmp.le.s32.totalorder 2, %s18
      // Predicated region
      $region73: #{lstm_model_forward.1} parent=5 // pred_check
        %p1497 = pneg %p1496
      $region74: #{lstm_model_forward.1} parent=5 // pred_check_branch
        %1499 = sbr.rel (%p1497) target = $region76
      $region75: #{lstm_model_forward.1} parent=5 // pred_region
        %s1500 = ssub.s32 %s18, 2
      $region76: #{lstm_model_forward.1} parent=5 // pred_fallthru
        _
    $region6: #{lstm_model_forward.1} parent=1 // loop_footer
      %s22 = sadd.s32 1, %s18
    $region7: #{lstm_model_forward.1} parent=1 // loop_footer_branch
      %17 = sbr.rel target = $region3
    $region8: #{lstm_model_forward.1} parent=1 // loop_exit
      _
    %1501 = vsyncpa [#allocation6], 1
    %s1502 = scalar_lea.sflag [#allocation6], 1
    %1503 = vsyncpa %s1502, 1
    %1504 = vsyncpa [#allocation8], 1
    %s1505 = scalar_lea.sflag [#allocation8], 1
    %1506 = vsyncpa %s1505, 1

</llo_original>
